<compile_context>
chip_gen: v6e
topology: v6e:2x2x1
jax: 0.10.0
libtpu: 0.0.40
codegen_flags: <defaults>
</compile_context>

<pallas_src>
import math

import jax
import jax.numpy as jnp
import numpy as np
from jax import lax
from jax.experimental import pallas as pl
from jax.experimental.pallas import tpu as pltpu

F32 = jnp.float32
BF16 = jnp.bfloat16
BN_EPS = 1e-5
LOG2 = math.log(2.0)
LANE = 128          # TPU vreg lane width; the packed embedding slab width.


def _softplus(x):
    # numerically stable softplus, matches F.softplus semantics (f32 math)
    return jnp.maximum(x, 0.0) + jnp.log1p(jnp.exp(-jnp.abs(x)))


# ----------------------------------------------------------------------------
# Fused InfoGraph forward kernel
# ----------------------------------------------------------------------------
def _make_fused_kernel(n_layer, n_nodes, n_graphs):
    # Guard against n_graphs == 1 (original DGL loss divides by G-1 -> NaN).
    neg_denom = float(n_nodes * max(n_graphs - 1, 1))
    pos_denom = float(n_nodes)

    def kernel(feat_ref, adj_ref, pool_ref, pos_ref,
               enc_w_ref, enc_vec_ref, ffn_w_ref, ffn_b_ref, o_ref):
        adj = adj_ref[...]                        # bf16 [N, N], I + A/deg
        x = feat_ref[...]                         # f32  [N, LANE]
        enc_vec = enc_vec_ref[...]                # f32  [n_layer*4, LANE]
        ffn_b = ffn_b_ref[...]                    # f32  [8, LANE]

        # ---- GIN encoder: n_layer x (mean-agg(+self) + 2-layer MLP + ReLU + BN)
        # Layer l's output occupies lanes [l*hid, (l+1)*hid) of the 128-lane
        # slab (baked into w2/b2/gamma/beta on the host), so the concat of all
        # layers is simply the running sum `local_emb`.
        local_emb = jnp.zeros_like(x)
        for l in range(n_layer):
            w1 = enc_w_ref[2 * l]                 # bf16 [LANE, LANE]
            w2 = enc_w_ref[2 * l + 1]             # bf16 [LANE, LANE]
            b1 = enc_vec[4 * l + 0:4 * l + 1]     # f32  [1, LANE]
            b2 = enc_vec[4 * l + 1:4 * l + 2]
            gamma = enc_vec[4 * l + 2:4 * l + 3]
            beta = enc_vec[4 * l + 3:4 * l + 4]

            h = jnp.dot(adj, x.astype(BF16),
                        preferred_element_type=F32)      # (I + A/deg) @ x
            h = jnp.dot(h.astype(BF16), w1,
                        preferred_element_type=F32) + b1
            h = jnp.maximum(h, 0.0)
            h = jnp.dot(h.astype(BF16), w2,
                        preferred_element_type=F32) + b2
            h = jnp.maximum(h, 0.0)                      # outer F.relu
            # BatchNorm1d, training-mode batch statistics (biased variance),
            # single pass: var = E[h^2] - mean^2.
            mean = jnp.mean(h, axis=0, keepdims=True)
            mean_sq = jnp.mean(h * h, axis=0, keepdims=True)
            var = jnp.maximum(mean_sq - mean * mean, 0.0)
            x = gamma * ((h - mean) * lax.rsqrt(var + BN_EPS)) + beta
            local_emb = local_emb + x

        # ---- AvgPooling: per-graph mean of node embeddings ----
        local_bf = local_emb.astype(BF16)                # cast once, reuse
        global_emb = jnp.dot(pool_ref[...], local_bf,
                             preferred_element_type=F32)  # [G, LANE] f32
        global_bf = global_emb.astype(BF16)

        # ---- FeedforwardNetwork: 3-layer MLP + jump connection ----
        def ffn(vb, d):                                  # vb: bf16 input
            h = jnp.maximum(jnp.dot(vb, ffn_w_ref[4 * d + 0],
                                    preferred_element_type=F32)
                            + ffn_b[4 * d + 0:4 * d + 1], 0.0)
            h = jnp.maximum(jnp.dot(h.astype(BF16), ffn_w_ref[4 * d + 1],
                                    preferred_element_type=F32)
                            + ffn_b[4 * d + 1:4 * d + 2], 0.0)
            h = jnp.maximum(jnp.dot(h.astype(BF16), ffn_w_ref[4 * d + 2],
                                    preferred_element_type=F32)
                            + ffn_b[4 * d + 2:4 * d + 3], 0.0)
            j = jnp.dot(vb, ffn_w_ref[4 * d + 3],
                        preferred_element_type=F32) + ffn_b[4 * d + 3:4 * d + 4]
            return h + j

        local_h = ffn(local_bf, 0)                       # [N, LANE] f32
        global_h = ffn(global_bf, 1)                     # [G, LANE] f32

        # ---- JSD local/global loss (standard DGL InfoGraph estimator) ----
        # res[n, g] = <local_h[n], global_h[g]>; contract last dims so
        # global_h is never transposed/materialized.
        res = lax.dot_general(local_h.astype(BF16), global_h.astype(BF16),
                              dimension_numbers=(((1,), (1,)), ((), ())),
                              preferred_element_type=F32)   # [N, G]
        pos = pos_ref[...]                                   # f32 {0,1}
        sp = _softplus(-res)                                 # single pass
        s_all = jnp.sum(sp + res)
        s_ps = jnp.sum(pos * sp)
        s_pr = jnp.sum(pos * res)
        # E_pos = sum_pos(log2 - softplus(-res)) / N
        # E_neg = sum_neg(softplus(-res) + res - log2) / (N * (G - 1))
        e_pos = (LOG2 * n_nodes - s_ps) / pos_denom
        e_neg = (s_all - s_ps - s_pr
                 - LOG2 * n_nodes * (n_graphs - 1)) / neg_denom
        o_ref[0] = e_neg - e_pos

    return kernel


def infograph_forward(packed):
    """Runs the fused forward pass; returns the scalar InfoGraph loss."""
    n_layer = packed["enc_w"].shape[0] // 2
    n_nodes = packed["feat"].shape[0]
    n_graphs = packed["pool"].shape[0]

    args = [packed["feat"], packed["adj"], packed["pool"], packed["pos"],
            packed["enc_w"], packed["enc_vec"],
            packed["ffn_w"], packed["ffn_b"]]

    # Advisory cost estimate so XLA can schedule around the custom call.
    flops = 0
    flops += n_layer * (2 * n_nodes * n_nodes * LANE          # adj @ x
                        + 2 * 2 * n_nodes * LANE * LANE)      # two linears
    flops += 2 * n_graphs * n_nodes * LANE                    # pooling
    flops += 2 * 4 * (n_nodes + n_graphs) * LANE * LANE       # two FFNs
    flops += 2 * n_nodes * n_graphs * LANE                    # loss scores
    transcendentals = n_layer * LANE + 2 * n_nodes * n_graphs
    bytes_accessed = sum(int(np.prod(a.shape)) * a.dtype.itemsize
                         for a in args) + 4

    kernel = _make_fused_kernel(n_layer, n_nodes, n_graphs)
    loss = pl.pallas_call(
        kernel,
        out_shape=jax.ShapeDtypeStruct((1,), F32),
        in_specs=[pl.BlockSpec(memory_space=pltpu.MemorySpace.VMEM)
                  for _ in args],
        out_specs=pl.BlockSpec(memory_space=pltpu.MemorySpace.SMEM),
        compiler_params=pltpu.CompilerParams(
            vmem_limit_bytes=32 * 1024 * 1024),
        cost_estimate=pl.CostEstimate(flops=int(flops),
                                      transcendentals=int(transcendentals),
                                      bytes_accessed=int(bytes_accessed)),
    )(*args)
    return loss[0]


# ----------------------------------------------------------------------------
# Parameter init (mimics PyTorch Linear default uniform init)
# ----------------------------------------------------------------------------
def _linear_params(key, fan_in, fan_out):
    kw, kb = jax.random.split(key)
    bound = 1.0 / math.sqrt(fan_in)
    w = jax.random.uniform(kw, (fan_in, fan_out), F32, -bound, bound)
    b = jax.random.uniform(kb, (1, fan_out), F32, -bound, bound)
    return w, b


def init_params(key, in_dim, hid_dim, n_layer):
    emb_dim = hid_dim * n_layer
    params = {"encoder": [], "local_d": {}, "global_d": {}}
    for i in range(n_layer):
        n_in = in_dim if i == 0 else hid_dim
        key, k1, k2 = jax.random.split(key, 3)
        w1, b1 = _linear_params(k1, n_in, hid_dim)
        w2, b2 = _linear_params(k2, hid_dim, hid_dim)
        params["encoder"].append({
            "w1": w1, "b1": b1, "w2": w2, "b2": b2,
            "gamma": jnp.ones((1, hid_dim), F32),   # BatchNorm1d affine init
            "beta": jnp.zeros((1, hid_dim), F32),
        })
    for name in ("local_d", "global_d"):
        key, k1, k2, k3, kj = jax.random.split(key, 5)
        w1, b1 = _linear_params(k1, emb_dim, emb_dim)
        w2, b2 = _linear_params(k2, emb_dim, emb_dim)
        w3, b3 = _linear_params(k3, emb_dim, emb_dim)
        wj, bj = _linear_params(kj, emb_dim, emb_dim)
        params[name] = {"w1": w1, "b1": b1, "w2": w2, "b2": b2,
                        "w3": w3, "b3": b3, "wj": wj, "bj": bj}
    return params


# ----------------------------------------------------------------------------
# Host-side packing: 128-lane slab layout + stacked parameter arrays
# ----------------------------------------------------------------------------
def pack_params(params, in_dim, hid_dim, n_layer):
    """Packs all parameters into 4 stacked, 128-lane-dense arrays.

    Slab layout: GIN layer l's output lives at lanes [l*hid, (l+1)*hid) of one
    [*, 128] slab.  Layer l's w2/b2/gamma/beta are column-offset accordingly,
    and layer l+1's w1 input rows are shifted to read from that offset.  The
    concat of all layers is then just the sum of the per-layer slabs, and the
    FFN weights only need a plain top-left pad of [emb, emb] -> [128, 128].
    Padded rows/cols are exact zeros -> real outputs are unchanged.
    """
    emb = hid_dim * n_layer
    assert emb <= LANE, "slab packing requires n_layer * hid_dim <= 128"

    enc_w = np.zeros((n_layer * 2, LANE, LANE), np.float32)
    enc_vec = np.zeros((n_layer * 4, LANE), np.float32)
    for l, lp in enumerate(params["encoder"]):
        n_in = in_dim if l == 0 else hid_dim
        in_off = 0 if l == 0 else (l - 1) * hid_dim
        out_off = l * hid_dim
        enc_w[2 * l, in_off:in_off + n_in, 0:hid_dim] = \
            np.asarray(lp["w1"], np.float32)
        enc_w[2 * l + 1, 0:hid_dim, out_off:out_off + hid_dim] = \
            np.asarray(lp["w2"], np.float32)
        enc_vec[4 * l + 0, 0:hid_dim] = \
            np.asarray(lp["b1"], np.float32).reshape(-1)
        enc_vec[4 * l + 1, out_off:out_off + hid_dim] = \
            np.asarray(lp["b2"], np.float32).reshape(-1)
        enc_vec[4 * l + 2, out_off:out_off + hid_dim] = \
            np.asarray(lp["gamma"], np.float32).reshape(-1)
        enc_vec[4 * l + 3, out_off:out_off + hid_dim] = \
            np.asarray(lp["beta"], np.float32).reshape(-1)

    ffn_w = np.zeros((2 * 4, LANE, LANE), np.float32)
    ffn_b = np.zeros((2 * 4, LANE), np.float32)
    for d, name in enumerate(("local_d", "global_d")):
        p = params[name]
        for j, (wk, bk) in enumerate(
                (("w1", "b1"), ("w2", "b2"), ("w3", "b3"), ("wj", "bj"))):
            ffn_w[4 * d + j, :emb, :emb] = np.asarray(p[wk], np.float32)
            ffn_b[4 * d + j, :emb] = np.asarray(p[bk], np.float32).reshape(-1)

    return {
        "enc_w": jnp.asarray(enc_w, BF16),
        "enc_vec": jnp.asarray(enc_vec, F32),
        "ffn_w": jnp.asarray(ffn_w, BF16),
        "ffn_b": jnp.asarray(ffn_b, F32),
    }


def pad_features(feat, in_dim):
    n = feat.shape[0]
    out = np.zeros((n, LANE), np.float32)
    out[:, :in_dim] = np.asarray(feat, np.float32)
    return jnp.asarray(out, F32)


def build_graph(nodes_per_graph, num_graphs):
    """Batched graph of `num_graphs` undirected rings.  Returns (I + A/deg)
    (GIN self term folded into the mean aggregator), the AvgPooling matrix and
    the node->graph one-hot positive mask."""
    n = nodes_per_graph * num_graphs
    adj = np.zeros((n, n), np.float32)
    graph_id = np.zeros((n,), np.int32)
    for g in range(num_graphs):
        base = g * nodes_per_graph
        for k in range(nodes_per_graph):
            graph_id[base + k] = g
            src = base + k
            dst = base + (k + 1) % nodes_per_graph
            adj[dst, src] = 1.0
            adj[src, dst] = 1.0
    indeg = np.maximum(adj.sum(axis=1, keepdims=True), 1.0)
    adj_self = adj / indeg + np.eye(n, dtype=np.float32)  # (1+eps)x + mean, eps=0
    pool_mat = np.zeros((num_graphs, n), np.float32)
    for g in range(num_graphs):
        members = graph_id == g
        pool_mat[g, members] = 1.0 / members.sum()        # AvgPooling
    pos_mask = (graph_id[:, None] ==
                np.arange(num_graphs)[None, :]).astype(np.float32)
    return (jnp.asarray(adj_self, BF16), jnp.asarray(pool_mat, BF16),
            jnp.asarray(pos_mask, F32))


if __name__ == "__main__":
    in_dim, hid_dim, n_layer = 8, 16, 2
    nodes_per_graph, num_graphs = 4, 3
    n_nodes = nodes_per_graph * num_graphs        # 12 nodes, 3 graphs

    key = jax.random.PRNGKey(0)
    key, k_feat, k_params = jax.random.split(key, 3)

    feat = jax.random.normal(k_feat, (n_nodes, in_dim), F32)
    adj_self, pool_mat, pos_mask = build_graph(nodes_per_graph, num_graphs)
    params = init_params(k_params, in_dim, hid_dim, n_layer)

    packed = pack_params(params, in_dim, hid_dim, n_layer)
    packed["feat"] = pad_features(feat, in_dim)
    packed["adj"] = adj_self
    packed["pool"] = pool_mat
    packed["pos"] = pos_mask

    # TODO(synk): local_global_loss_ is not in the provided source; implemented
    # as the standard DGL InfoGraph JSD local/global loss.
    loss = infograph_forward(packed)
    jax.block_until_ready(loss)
    assert jnp.isfinite(loss), "loss is not finite"
    print("KERNEL_OK")
</pallas_src>

<mosaic_0001>
module attributes {stable_mosaic.version = 11 : i64} {
  func.func @kernel(%arg0: memref<12x128xf32, #tpu.memory_space<vmem>>, %arg1: memref<12x12xbf16, #tpu.memory_space<vmem>>, %arg2: memref<3x12xbf16, #tpu.memory_space<vmem>>, %arg3: memref<12x3xf32, #tpu.memory_space<vmem>>, %arg4: memref<4x128x128xbf16, #tpu.memory_space<vmem>>, %arg5: memref<8x128xf32, #tpu.memory_space<vmem>>, %arg6: memref<8x128x128xbf16, #tpu.memory_space<vmem>>, %arg7: memref<8x128xf32, #tpu.memory_space<vmem>>, %arg8: memref<1xf32, #tpu.memory_space<smem>>) attributes {dimension_semantics = [], scalar_prefetch = 0 : i64, scratch_operands = 0 : i64, tpu.core_type = #tpu.core_type<tc>} {
    %c0 = arith.constant 0 : index
    %c0_0 = arith.constant 0 : index
    %0 = vector.load %arg1[%c0, %c0_0] : memref<12x12xbf16, #tpu.memory_space<vmem>>, vector<12x12xbf16>
    %c0_1 = arith.constant 0 : index
    %c0_2 = arith.constant 0 : index
    %1 = vector.load %arg0[%c0_1, %c0_2] : memref<12x128xf32, #tpu.memory_space<vmem>>, vector<12x128xf32>
    %c0_3 = arith.constant 0 : index
    %c0_4 = arith.constant 0 : index
    %2 = vector.load %arg5[%c0_3, %c0_4] : memref<8x128xf32, #tpu.memory_space<vmem>>, vector<8x128xf32>
    %c0_5 = arith.constant 0 : index
    %c0_6 = arith.constant 0 : index
    %3 = vector.load %arg7[%c0_5, %c0_6] : memref<8x128xf32, #tpu.memory_space<vmem>>, vector<8x128xf32>
    %cst = arith.constant 0.000000e+00 : f32
    %4 = vector.broadcast %cst : f32 to vector<12x128xf32>
    %c0_7 = arith.constant 0 : index
    %c0_8 = arith.constant 0 : index
    %c0_9 = arith.constant 0 : index
    %5 = vector.load %arg4[%c0_7, %c0_8, %c0_9] : memref<4x128x128xbf16, #tpu.memory_space<vmem>>, vector<1x128x128xbf16>
    %6 = vector.shape_cast %5 : vector<1x128x128xbf16> to vector<128x128xbf16>
    %c1 = arith.constant 1 : index
    %c0_10 = arith.constant 0 : index
    %c0_11 = arith.constant 0 : index
    %7 = vector.load %arg4[%c1, %c0_10, %c0_11] : memref<4x128x128xbf16, #tpu.memory_space<vmem>>, vector<1x128x128xbf16>
    %8 = vector.shape_cast %7 : vector<1x128x128xbf16> to vector<128x128xbf16>
    %9 = vector.extract_strided_slice %2 {offsets = [0, 0], sizes = [1, 128], strides = [1, 1]} : vector<8x128xf32> to vector<1x128xf32>
    %10 = vector.extract_strided_slice %2 {offsets = [1, 0], sizes = [1, 128], strides = [1, 1]} : vector<8x128xf32> to vector<1x128xf32>
    %11 = vector.extract_strided_slice %2 {offsets = [2, 0], sizes = [1, 128], strides = [1, 1]} : vector<8x128xf32> to vector<1x128xf32>
    %12 = vector.extract_strided_slice %2 {offsets = [3, 0], sizes = [1, 128], strides = [1, 1]} : vector<8x128xf32> to vector<1x128xf32>
    %13 = arith.truncf %1 : vector<12x128xf32> to vector<12x128xbf16>
    %cst_12 = arith.constant dense<0.000000e+00> : vector<12x128xf32>
    %14 = tpu.matmul %0, %13, %cst_12 {dimension_numbers = #tpu.dot_dimension_numbers<[1], [0], [0], [1], [0, 0, 1, 1], [], []>} : vector<12x12xbf16>, vector<12x128xbf16>, vector<12x128xf32> -> vector<12x128xf32>
    %15 = arith.truncf %14 : vector<12x128xf32> to vector<12x128xbf16>
    %cst_13 = arith.constant dense<0.000000e+00> : vector<12x128xf32>
    %16 = tpu.matmul %15, %6, %cst_13 {dimension_numbers = #tpu.dot_dimension_numbers<[1], [0], [0], [1], [0, 0, 1, 1], [], []>} : vector<12x128xbf16>, vector<128x128xbf16>, vector<12x128xf32> -> vector<12x128xf32>
    %17 = vector.broadcast %9 : vector<1x128xf32> to vector<12x128xf32>
    %18 = arith.addf %16, %17 : vector<12x128xf32>
    %cst_14 = arith.constant 0.000000e+00 : f32
    %19 = vector.broadcast %cst_14 : f32 to vector<12x128xf32>
    %20 = arith.maximumf %18, %19 : vector<12x128xf32>
    %21 = arith.truncf %20 : vector<12x128xf32> to vector<12x128xbf16>
    %cst_15 = arith.constant dense<0.000000e+00> : vector<12x128xf32>
    %22 = tpu.matmul %21, %8, %cst_15 {dimension_numbers = #tpu.dot_dimension_numbers<[1], [0], [0], [1], [0, 0, 1, 1], [], []>} : vector<12x128xbf16>, vector<128x128xbf16>, vector<12x128xf32> -> vector<12x128xf32>
    %23 = vector.broadcast %10 : vector<1x128xf32> to vector<12x128xf32>
    %24 = arith.addf %22, %23 : vector<12x128xf32>
    %cst_16 = arith.constant 0.000000e+00 : f32
    %25 = vector.broadcast %cst_16 : f32 to vector<12x128xf32>
    %26 = arith.maximumf %24, %25 : vector<12x128xf32>
    %cst_17 = arith.constant dense<0.000000e+00> : vector<128xf32>
    %27 = vector.multi_reduction <add>, %26, %cst_17 [0] : vector<12x128xf32> to vector<128xf32>
    %28 = vector.shape_cast %27 : vector<128xf32> to vector<1x128xf32>
    %cst_18 = arith.constant 1.200000e+01 : f32
    %29 = vector.broadcast %cst_18 : f32 to vector<1x128xf32>
    %30 = arith.divf %28, %29 : vector<1x128xf32>
    %31 = arith.mulf %26, %26 : vector<12x128xf32>
    %cst_19 = arith.constant dense<0.000000e+00> : vector<128xf32>
    %32 = vector.multi_reduction <add>, %31, %cst_19 [0] : vector<12x128xf32> to vector<128xf32>
    %33 = vector.shape_cast %32 : vector<128xf32> to vector<1x128xf32>
    %cst_20 = arith.constant 1.200000e+01 : f32
    %34 = vector.broadcast %cst_20 : f32 to vector<1x128xf32>
    %35 = arith.divf %33, %34 : vector<1x128xf32>
    %36 = arith.mulf %30, %30 : vector<1x128xf32>
    %37 = arith.subf %35, %36 : vector<1x128xf32>
    %cst_21 = arith.constant 0.000000e+00 : f32
    %38 = vector.broadcast %cst_21 : f32 to vector<1x128xf32>
    %39 = arith.maximumf %37, %38 : vector<1x128xf32>
    %40 = vector.broadcast %30 : vector<1x128xf32> to vector<12x128xf32>
    %41 = arith.subf %26, %40 : vector<12x128xf32>
    %cst_22 = arith.constant 9.99999974E-6 : f32
    %42 = vector.broadcast %cst_22 : f32 to vector<1x128xf32>
    %43 = arith.addf %39, %42 : vector<1x128xf32>
    %44 = math.rsqrt %43 : vector<1x128xf32>
    %45 = vector.broadcast %44 : vector<1x128xf32> to vector<12x128xf32>
    %46 = arith.mulf %41, %45 : vector<12x128xf32>
    %47 = vector.broadcast %11 : vector<1x128xf32> to vector<12x128xf32>
    %48 = arith.mulf %47, %46 : vector<12x128xf32>
    %49 = vector.broadcast %12 : vector<1x128xf32> to vector<12x128xf32>
    %50 = arith.addf %48, %49 : vector<12x128xf32>
    %51 = arith.addf %4, %50 : vector<12x128xf32>
    %c2 = arith.constant 2 : index
    %c0_23 = arith.constant 0 : index
    %c0_24 = arith.constant 0 : index
    %52 = vector.load %arg4[%c2, %c0_23, %c0_24] : memref<4x128x128xbf16, #tpu.memory_space<vmem>>, vector<1x128x128xbf16>
    %53 = vector.shape_cast %52 : vector<1x128x128xbf16> to vector<128x128xbf16>
    %c3 = arith.constant 3 : index
    %c0_25 = arith.constant 0 : index
    %c0_26 = arith.constant 0 : index
    %54 = vector.load %arg4[%c3, %c0_25, %c0_26] : memref<4x128x128xbf16, #tpu.memory_space<vmem>>, vector<1x128x128xbf16>
    %55 = vector.shape_cast %54 : vector<1x128x128xbf16> to vector<128x128xbf16>
    %56 = vector.extract_strided_slice %2 {offsets = [4, 0], sizes = [1, 128], strides = [1, 1]} : vector<8x128xf32> to vector<1x128xf32>
    %57 = vector.extract_strided_slice %2 {offsets = [5, 0], sizes = [1, 128], strides = [1, 1]} : vector<8x128xf32> to vector<1x128xf32>
    %58 = vector.extract_strided_slice %2 {offsets = [6, 0], sizes = [1, 128], strides = [1, 1]} : vector<8x128xf32> to vector<1x128xf32>
    %59 = vector.extract_strided_slice %2 {offsets = [7, 0], sizes = [1, 128], strides = [1, 1]} : vector<8x128xf32> to vector<1x128xf32>
    %60 = arith.truncf %50 : vector<12x128xf32> to vector<12x128xbf16>
    %cst_27 = arith.constant dense<0.000000e+00> : vector<12x128xf32>
    %61 = tpu.matmul %0, %60, %cst_27 {dimension_numbers = #tpu.dot_dimension_numbers<[1], [0], [0], [1], [0, 0, 1, 1], [], []>} : vector<12x12xbf16>, vector<12x128xbf16>, vector<12x128xf32> -> vector<12x128xf32>
    %62 = arith.truncf %61 : vector<12x128xf32> to vector<12x128xbf16>
    %cst_28 = arith.constant dense<0.000000e+00> : vector<12x128xf32>
    %63 = tpu.matmul %62, %53, %cst_28 {dimension_numbers = #tpu.dot_dimension_numbers<[1], [0], [0], [1], [0, 0, 1, 1], [], []>} : vector<12x128xbf16>, vector<128x128xbf16>, vector<12x128xf32> -> vector<12x128xf32>
    %64 = vector.broadcast %56 : vector<1x128xf32> to vector<12x128xf32>
    %65 = arith.addf %63, %64 : vector<12x128xf32>
    %cst_29 = arith.constant 0.000000e+00 : f32
    %66 = vector.broadcast %cst_29 : f32 to vector<12x128xf32>
    %67 = arith.maximumf %65, %66 : vector<12x128xf32>
    %68 = arith.truncf %67 : vector<12x128xf32> to vector<12x128xbf16>
    %cst_30 = arith.constant dense<0.000000e+00> : vector<12x128xf32>
    %69 = tpu.matmul %68, %55, %cst_30 {dimension_numbers = #tpu.dot_dimension_numbers<[1], [0], [0], [1], [0, 0, 1, 1], [], []>} : vector<12x128xbf16>, vector<128x128xbf16>, vector<12x128xf32> -> vector<12x128xf32>
    %70 = vector.broadcast %57 : vector<1x128xf32> to vector<12x128xf32>
    %71 = arith.addf %69, %70 : vector<12x128xf32>
    %cst_31 = arith.constant 0.000000e+00 : f32
    %72 = vector.broadcast %cst_31 : f32 to vector<12x128xf32>
    %73 = arith.maximumf %71, %72 : vector<12x128xf32>
    %cst_32 = arith.constant dense<0.000000e+00> : vector<128xf32>
    %74 = vector.multi_reduction <add>, %73, %cst_32 [0] : vector<12x128xf32> to vector<128xf32>
    %75 = vector.shape_cast %74 : vector<128xf32> to vector<1x128xf32>
    %cst_33 = arith.constant 1.200000e+01 : f32
    %76 = vector.broadcast %cst_33 : f32 to vector<1x128xf32>
    %77 = arith.divf %75, %76 : vector<1x128xf32>
    %78 = arith.mulf %73, %73 : vector<12x128xf32>
    %cst_34 = arith.constant dense<0.000000e+00> : vector<128xf32>
    %79 = vector.multi_reduction <add>, %78, %cst_34 [0] : vector<12x128xf32> to vector<128xf32>
    %80 = vector.shape_cast %79 : vector<128xf32> to vector<1x128xf32>
    %cst_35 = arith.constant 1.200000e+01 : f32
    %81 = vector.broadcast %cst_35 : f32 to vector<1x128xf32>
    %82 = arith.divf %80, %81 : vector<1x128xf32>
    %83 = arith.mulf %77, %77 : vector<1x128xf32>
    %84 = arith.subf %82, %83 : vector<1x128xf32>
    %cst_36 = arith.constant 0.000000e+00 : f32
    %85 = vector.broadcast %cst_36 : f32 to vector<1x128xf32>
    %86 = arith.maximumf %84, %85 : vector<1x128xf32>
    %87 = vector.broadcast %77 : vector<1x128xf32> to vector<12x128xf32>
    %88 = arith.subf %73, %87 : vector<12x128xf32>
    %cst_37 = arith.constant 9.99999974E-6 : f32
    %89 = vector.broadcast %cst_37 : f32 to vector<1x128xf32>
    %90 = arith.addf %86, %89 : vector<1x128xf32>
    %91 = math.rsqrt %90 : vector<1x128xf32>
    %92 = vector.broadcast %91 : vector<1x128xf32> to vector<12x128xf32>
    %93 = arith.mulf %88, %92 : vector<12x128xf32>
    %94 = vector.broadcast %58 : vector<1x128xf32> to vector<12x128xf32>
    %95 = arith.mulf %94, %93 : vector<12x128xf32>
    %96 = vector.broadcast %59 : vector<1x128xf32> to vector<12x128xf32>
    %97 = arith.addf %95, %96 : vector<12x128xf32>
    %98 = arith.addf %51, %97 : vector<12x128xf32>
    %99 = arith.truncf %98 : vector<12x128xf32> to vector<12x128xbf16>
    %c0_38 = arith.constant 0 : index
    %c0_39 = arith.constant 0 : index
    %100 = vector.load %arg2[%c0_38, %c0_39] : memref<3x12xbf16, #tpu.memory_space<vmem>>, vector<3x12xbf16>
    %cst_40 = arith.constant dense<0.000000e+00> : vector<3x128xf32>
    %101 = tpu.matmul %100, %99, %cst_40 {dimension_numbers = #tpu.dot_dimension_numbers<[1], [0], [0], [1], [0, 0, 1, 1], [], []>} : vector<3x12xbf16>, vector<12x128xbf16>, vector<3x128xf32> -> vector<3x128xf32>
    %102 = arith.truncf %101 : vector<3x128xf32> to vector<3x128xbf16>
    %c0_41 = arith.constant 0 : index
    %c0_42 = arith.constant 0 : index
    %c0_43 = arith.constant 0 : index
    %103 = vector.load %arg6[%c0_41, %c0_42, %c0_43] : memref<8x128x128xbf16, #tpu.memory_space<vmem>>, vector<1x128x128xbf16>
    %104 = vector.shape_cast %103 : vector<1x128x128xbf16> to vector<128x128xbf16>
    %cst_44 = arith.constant dense<0.000000e+00> : vector<12x128xf32>
    %105 = tpu.matmul %99, %104, %cst_44 {dimension_numbers = #tpu.dot_dimension_numbers<[1], [0], [0], [1], [0, 0, 1, 1], [], []>} : vector<12x128xbf16>, vector<128x128xbf16>, vector<12x128xf32> -> vector<12x128xf32>
    %106 = vector.extract_strided_slice %3 {offsets = [0, 0], sizes = [1, 128], strides = [1, 1]} : vector<8x128xf32> to vector<1x128xf32>
    %107 = vector.broadcast %106 : vector<1x128xf32> to vector<12x128xf32>
    %108 = arith.addf %105, %107 : vector<12x128xf32>
    %cst_45 = arith.constant 0.000000e+00 : f32
    %109 = vector.broadcast %cst_45 : f32 to vector<12x128xf32>
    %110 = arith.maximumf %108, %109 : vector<12x128xf32>
    %111 = arith.truncf %110 : vector<12x128xf32> to vector<12x128xbf16>
    %c1_46 = arith.constant 1 : index
    %c0_47 = arith.constant 0 : index
    %c0_48 = arith.constant 0 : index
    %112 = vector.load %arg6[%c1_46, %c0_47, %c0_48] : memref<8x128x128xbf16, #tpu.memory_space<vmem>>, vector<1x128x128xbf16>
    %113 = vector.shape_cast %112 : vector<1x128x128xbf16> to vector<128x128xbf16>
    %cst_49 = arith.constant dense<0.000000e+00> : vector<12x128xf32>
    %114 = tpu.matmul %111, %113, %cst_49 {dimension_numbers = #tpu.dot_dimension_numbers<[1], [0], [0], [1], [0, 0, 1, 1], [], []>} : vector<12x128xbf16>, vector<128x128xbf16>, vector<12x128xf32> -> vector<12x128xf32>
    %115 = vector.extract_strided_slice %3 {offsets = [1, 0], sizes = [1, 128], strides = [1, 1]} : vector<8x128xf32> to vector<1x128xf32>
    %116 = vector.broadcast %115 : vector<1x128xf32> to vector<12x128xf32>
    %117 = arith.addf %114, %116 : vector<12x128xf32>
    %cst_50 = arith.constant 0.000000e+00 : f32
    %118 = vector.broadcast %cst_50 : f32 to vector<12x128xf32>
    %119 = arith.maximumf %117, %118 : vector<12x128xf32>
    %120 = arith.truncf %119 : vector<12x128xf32> to vector<12x128xbf16>
    %c2_51 = arith.constant 2 : index
    %c0_52 = arith.constant 0 : index
    %c0_53 = arith.constant 0 : index
    %121 = vector.load %arg6[%c2_51, %c0_52, %c0_53] : memref<8x128x128xbf16, #tpu.memory_space<vmem>>, vector<1x128x128xbf16>
    %122 = vector.shape_cast %121 : vector<1x128x128xbf16> to vector<128x128xbf16>
    %cst_54 = arith.constant dense<0.000000e+00> : vector<12x128xf32>
    %123 = tpu.matmul %120, %122, %cst_54 {dimension_numbers = #tpu.dot_dimension_numbers<[1], [0], [0], [1], [0, 0, 1, 1], [], []>} : vector<12x128xbf16>, vector<128x128xbf16>, vector<12x128xf32> -> vector<12x128xf32>
    %124 = vector.extract_strided_slice %3 {offsets = [2, 0], sizes = [1, 128], strides = [1, 1]} : vector<8x128xf32> to vector<1x128xf32>
    %125 = vector.broadcast %124 : vector<1x128xf32> to vector<12x128xf32>
    %126 = arith.addf %123, %125 : vector<12x128xf32>
    %cst_55 = arith.constant 0.000000e+00 : f32
    %127 = vector.broadcast %cst_55 : f32 to vector<12x128xf32>
    %128 = arith.maximumf %126, %127 : vector<12x128xf32>
    %c3_56 = arith.constant 3 : index
    %c0_57 = arith.constant 0 : index
    %c0_58 = arith.constant 0 : index
    %129 = vector.load %arg6[%c3_56, %c0_57, %c0_58] : memref<8x128x128xbf16, #tpu.memory_space<vmem>>, vector<1x128x128xbf16>
    %130 = vector.shape_cast %129 : vector<1x128x128xbf16> to vector<128x128xbf16>
    %cst_59 = arith.constant dense<0.000000e+00> : vector<12x128xf32>
    %131 = tpu.matmul %99, %130, %cst_59 {dimension_numbers = #tpu.dot_dimension_numbers<[1], [0], [0], [1], [0, 0, 1, 1], [], []>} : vector<12x128xbf16>, vector<128x128xbf16>, vector<12x128xf32> -> vector<12x128xf32>
    %132 = vector.extract_strided_slice %3 {offsets = [3, 0], sizes = [1, 128], strides = [1, 1]} : vector<8x128xf32> to vector<1x128xf32>
    %133 = vector.broadcast %132 : vector<1x128xf32> to vector<12x128xf32>
    %134 = arith.addf %131, %133 : vector<12x128xf32>
    %135 = arith.addf %128, %134 : vector<12x128xf32>
    %c4 = arith.constant 4 : index
    %c0_60 = arith.constant 0 : index
    %c0_61 = arith.constant 0 : index
    %136 = vector.load %arg6[%c4, %c0_60, %c0_61] : memref<8x128x128xbf16, #tpu.memory_space<vmem>>, vector<1x128x128xbf16>
    %137 = vector.shape_cast %136 : vector<1x128x128xbf16> to vector<128x128xbf16>
    %cst_62 = arith.constant dense<0.000000e+00> : vector<3x128xf32>
    %138 = tpu.matmul %102, %137, %cst_62 {dimension_numbers = #tpu.dot_dimension_numbers<[1], [0], [0], [1], [0, 0, 1, 1], [], []>} : vector<3x128xbf16>, vector<128x128xbf16>, vector<3x128xf32> -> vector<3x128xf32>
    %139 = vector.extract_strided_slice %3 {offsets = [4, 0], sizes = [1, 128], strides = [1, 1]} : vector<8x128xf32> to vector<1x128xf32>
    %140 = vector.broadcast %139 : vector<1x128xf32> to vector<3x128xf32>
    %141 = arith.addf %138, %140 : vector<3x128xf32>
    %cst_63 = arith.constant 0.000000e+00 : f32
    %142 = vector.broadcast %cst_63 : f32 to vector<3x128xf32>
    %143 = arith.maximumf %141, %142 : vector<3x128xf32>
    %144 = arith.truncf %143 : vector<3x128xf32> to vector<3x128xbf16>
    %c5 = arith.constant 5 : index
    %c0_64 = arith.constant 0 : index
    %c0_65 = arith.constant 0 : index
    %145 = vector.load %arg6[%c5, %c0_64, %c0_65] : memref<8x128x128xbf16, #tpu.memory_space<vmem>>, vector<1x128x128xbf16>
    %146 = vector.shape_cast %145 : vector<1x128x128xbf16> to vector<128x128xbf16>
    %cst_66 = arith.constant dense<0.000000e+00> : vector<3x128xf32>
    %147 = tpu.matmul %144, %146, %cst_66 {dimension_numbers = #tpu.dot_dimension_numbers<[1], [0], [0], [1], [0, 0, 1, 1], [], []>} : vector<3x128xbf16>, vector<128x128xbf16>, vector<3x128xf32> -> vector<3x128xf32>
    %148 = vector.extract_strided_slice %3 {offsets = [5, 0], sizes = [1, 128], strides = [1, 1]} : vector<8x128xf32> to vector<1x128xf32>
    %149 = vector.broadcast %148 : vector<1x128xf32> to vector<3x128xf32>
    %150 = arith.addf %147, %149 : vector<3x128xf32>
    %cst_67 = arith.constant 0.000000e+00 : f32
    %151 = vector.broadcast %cst_67 : f32 to vector<3x128xf32>
    %152 = arith.maximumf %150, %151 : vector<3x128xf32>
    %153 = arith.truncf %152 : vector<3x128xf32> to vector<3x128xbf16>
    %c6 = arith.constant 6 : index
    %c0_68 = arith.constant 0 : index
    %c0_69 = arith.constant 0 : index
    %154 = vector.load %arg6[%c6, %c0_68, %c0_69] : memref<8x128x128xbf16, #tpu.memory_space<vmem>>, vector<1x128x128xbf16>
    %155 = vector.shape_cast %154 : vector<1x128x128xbf16> to vector<128x128xbf16>
    %cst_70 = arith.constant dense<0.000000e+00> : vector<3x128xf32>
    %156 = tpu.matmul %153, %155, %cst_70 {dimension_numbers = #tpu.dot_dimension_numbers<[1], [0], [0], [1], [0, 0, 1, 1], [], []>} : vector<3x128xbf16>, vector<128x128xbf16>, vector<3x128xf32> -> vector<3x128xf32>
    %157 = vector.extract_strided_slice %3 {offsets = [6, 0], sizes = [1, 128], strides = [1, 1]} : vector<8x128xf32> to vector<1x128xf32>
    %158 = vector.broadcast %157 : vector<1x128xf32> to vector<3x128xf32>
    %159 = arith.addf %156, %158 : vector<3x128xf32>
    %cst_71 = arith.constant 0.000000e+00 : f32
    %160 = vector.broadcast %cst_71 : f32 to vector<3x128xf32>
    %161 = arith.maximumf %159, %160 : vector<3x128xf32>
    %c7 = arith.constant 7 : index
    %c0_72 = arith.constant 0 : index
    %c0_73 = arith.constant 0 : index
    %162 = vector.load %arg6[%c7, %c0_72, %c0_73] : memref<8x128x128xbf16, #tpu.memory_space<vmem>>, vector<1x128x128xbf16>
    %163 = vector.shape_cast %162 : vector<1x128x128xbf16> to vector<128x128xbf16>
    %cst_74 = arith.constant dense<0.000000e+00> : vector<3x128xf32>
    %164 = tpu.matmul %102, %163, %cst_74 {dimension_numbers = #tpu.dot_dimension_numbers<[1], [0], [0], [1], [0, 0, 1, 1], [], []>} : vector<3x128xbf16>, vector<128x128xbf16>, vector<3x128xf32> -> vector<3x128xf32>
    %165 = vector.extract_strided_slice %3 {offsets = [7, 0], sizes = [1, 128], strides = [1, 1]} : vector<8x128xf32> to vector<1x128xf32>
    %166 = vector.broadcast %165 : vector<1x128xf32> to vector<3x128xf32>
    %167 = arith.addf %164, %166 : vector<3x128xf32>
    %168 = arith.addf %161, %167 : vector<3x128xf32>
    %169 = arith.truncf %135 : vector<12x128xf32> to vector<12x128xbf16>
    %170 = arith.truncf %168 : vector<3x128xf32> to vector<3x128xbf16>
    %cst_75 = arith.constant dense<0.000000e+00> : vector<12x3xf32>
    %171 = tpu.matmul %169, %170, %cst_75 {dimension_numbers = #tpu.dot_dimension_numbers<[1], [1], [0], [0], [0, 0, 1, 0], [], []>} : vector<12x128xbf16>, vector<3x128xbf16>, vector<12x3xf32> -> vector<12x3xf32>
    %c0_76 = arith.constant 0 : index
    %c0_77 = arith.constant 0 : index
    %172 = vector.load %arg3[%c0_76, %c0_77] : memref<12x3xf32, #tpu.memory_space<vmem>>, vector<12x3xf32>
    %cst_78 = arith.constant 0.000000e+00 : f32
    %173 = vector.broadcast %cst_78 : f32 to vector<12x3xf32>
    %174 = arith.subf %173, %171 : vector<12x3xf32>
    %cst_79 = arith.constant 0.000000e+00 : f32
    %175 = vector.broadcast %cst_79 : f32 to vector<12x3xf32>
    %176 = arith.maximumf %174, %175 : vector<12x3xf32>
    %177 = math.absf %174 : vector<12x3xf32>
    %cst_80 = arith.constant 0.000000e+00 : f32
    %178 = vector.broadcast %cst_80 : f32 to vector<12x3xf32>
    %179 = arith.subf %178, %177 : vector<12x3xf32>
    %180 = math.exp %179 : vector<12x3xf32>
    %181 = math.log1p %180 : vector<12x3xf32>
    %182 = arith.addf %176, %181 : vector<12x3xf32>
    %183 = arith.addf %182, %171 : vector<12x3xf32>
    %184 = vector.shape_cast %183 : vector<12x3xf32> to vector<1x12x3xf32>
    %cst_81 = arith.constant dense<0.000000e+00> : vector<1xf32>
    %185 = vector.multi_reduction <add>, %184, %cst_81 [1, 2] : vector<1x12x3xf32> to vector<1xf32>
    %186 = vector.shape_cast %185 : vector<1xf32> to vector<1x1x1xf32>
    %187 = vector.extract %186[0, 0, 0] : f32 from vector<1x1x1xf32>
    %188 = arith.mulf %172, %182 : vector<12x3xf32>
    %189 = vector.shape_cast %188 : vector<12x3xf32> to vector<1x12x3xf32>
    %cst_82 = arith.constant dense<0.000000e+00> : vector<1xf32>
    %190 = vector.multi_reduction <add>, %189, %cst_82 [1, 2] : vector<1x12x3xf32> to vector<1xf32>
    %191 = vector.shape_cast %190 : vector<1xf32> to vector<1x1x1xf32>
    %192 = vector.extract %191[0, 0, 0] : f32 from vector<1x1x1xf32>
    %193 = arith.mulf %172, %171 : vector<12x3xf32>
    %194 = vector.shape_cast %193 : vector<12x3xf32> to vector<1x12x3xf32>
    %cst_83 = arith.constant dense<0.000000e+00> : vector<1xf32>
    %195 = vector.multi_reduction <add>, %194, %cst_83 [1, 2] : vector<1x12x3xf32> to vector<1xf32>
    %196 = vector.shape_cast %195 : vector<1xf32> to vector<1x1x1xf32>
    %197 = vector.extract %196[0, 0, 0] : f32 from vector<1x1x1xf32>
    %cst_84 = arith.constant 8.31776618 : f32
    %198 = arith.subf %cst_84, %192 : f32
    %cst_85 = arith.constant 1.200000e+01 : f32
    %199 = arith.divf %198, %cst_85 : f32
    %200 = arith.subf %187, %192 : f32
    %201 = arith.subf %200, %197 : f32
    %cst_86 = arith.constant 16.6355324 : f32
    %202 = arith.subf %201, %cst_86 : f32
    %cst_87 = arith.constant 2.400000e+01 : f32
    %203 = arith.divf %202, %cst_87 : f32
    %204 = arith.subf %203, %199 : f32
    %c0_88 = arith.constant 0 : index
    %205 = memref.load %arg8[%c0_88] : memref<1xf32, #tpu.memory_space<smem>>
    memref.store %204, %arg8[%c0_88] : memref<1xf32, #tpu.memory_space<smem>>
    return
  }
}

</mosaic_0001>

<llo_original>
// kernel: tpu_custom_call.1
$region0: #{tpu_custom_call.1}
  #allocation0 [shape = 'u32[]', space=smem, size = 0x4, offset = 0x4, fixed_abs, tag = 'smem constant byte address 0x4 - core index']
  #allocation1 [shape = 'u32[144,128]{1,0:T(1,128)}', space=vmem, size = 0x12000, scoped, tag = 'internal scratch']
  %s0 = inlined_call_operand.vmem [shape: f32[12,128], index: 0, kind: input, shape index: {}]
  %s1 = inlined_call_operand.hbm [shape: bf16[12,12], index: 1, kind: input, shape index: {}]
  %s2 = inlined_call_operand.hbm [shape: bf16[3,12], index: 2, kind: input, shape index: {}]
  %s3 = inlined_call_operand.vmem [shape: f32[12,3], index: 3, kind: input, shape index: {}]
  %s4 = inlined_call_operand.hbm [shape: bf16[4,128,128], index: 4, kind: input, shape index: {}]
  %s5 = inlined_call_operand.vmem [shape: f32[8,128], index: 5, kind: input, shape index: {}]
  %s6 = inlined_call_operand.hbm [shape: bf16[8,128,128], index: 6, kind: input, shape index: {}]
  %s7 = inlined_call_operand.vmem [shape: f32[8,128], index: 7, kind: input, shape index: {}]
  %s8 = inlined_call_operand.hbm [shape: f32[1], index: 8, kind: output, shape index: {}]
  %s9 = sld [smem:[#allocation0]]
  $region58: #{tpu_custom_call.1} parent=0
    _
  %s11 = ssub.s32 1, %s9
  %s12 = scalar_select 0, %s11, %s9
  $region1: #{tpu_custom_call.1} parent=0
    #allocation2 [shape = 'u8[4096]{0}', space=vmem, size = 0x1000, scoped, tag = 'input window, operand 1, single buffered']
    #allocation3 [shape = 's32[1]{0}', space=sflag, size = 0x4, scoped, tag = 'scoped memory for tpu_custom_call.1']
    #allocation4 [shape = 's32[1]{0}', space=sflag, size = 0x4, scoped, tag = 'scoped memory for tpu_custom_call.1']
    #allocation5 [shape = 'u8[1024]{0}', space=vmem, size = 0x400, scoped, tag = 'input window, operand 2, single buffered']
    #allocation6 [shape = 's32[1]{0}', space=sflag, size = 0x4, scoped, tag = 'scoped memory for tpu_custom_call.1']
    #allocation7 [shape = 'u8[131072]{0}', space=vmem, size = 0x20000, scoped, tag = 'input window, operand 4, single buffered']
    #allocation8 [shape = 'u8[262144]{0}', space=vmem, size = 0x40000, scoped, tag = 'input window, operand 6, single buffered']
    #allocation9 [shape = 's32[1]{0}', space=sflag, size = 0x4, scoped, tag = 'scoped memory for tpu_custom_call.1']
    #allocation10 [shape = 'u8[512]{0}', space=smem, size = 0x200, scoped, tag = 'output window, operand 0, single buffered']
    %13 = vsyncpa [#allocation3], 0
    %14 = vsyncpa [#allocation6], 0
    %15 = vsyncpa [#allocation9], 0
    %16 = vsyncpa [#allocation4], 0
    // Predicated region
    $region2: #{tpu_custom_call.1} parent=1 // pred_check
      _
    $region3: #{tpu_custom_call.1} parent=1 // pred_check_branch
      %18 = sbr.rel (0) target = $region5
    $region4: #{tpu_custom_call.1} parent=1 // pred_region
      _
    $region5: #{tpu_custom_call.1} parent=1 // pred_fallthru
      _
    // Predicated region
    $region6: #{tpu_custom_call.1} parent=1 // pred_check
      _
    $region7: #{tpu_custom_call.1} parent=1 // pred_check_branch
      %20 = sbr.rel (0) target = $region9
    $region8: #{tpu_custom_call.1} parent=1 // pred_region
      %s22 = ssub.s32 128, 128
      %23 = vsyncadd [#allocation3], %s22
      %s24 = sshll.u32 [#allocation2], 4
      %s25 = int_to_ptr.vmem [resolvable:$true] %s24
      %30 = dma.hbm_to_vmem [thread:$0]  %s1, 128, %s25, [#allocation3], 64, 64, 4
    $region9: #{tpu_custom_call.1} parent=1 // pred_fallthru
      _
    // Predicated region
    $region10: #{tpu_custom_call.1} parent=1 // pred_check
      _
    $region11: #{tpu_custom_call.1} parent=1 // pred_check_branch
      %32 = sbr.rel (0) target = $region13
    $region12: #{tpu_custom_call.1} parent=1 // pred_region
      %s34 = ssub.s32 32, 32
      %35 = vsyncadd [#allocation6], %s34
      %s37 = sshll.u32 [#allocation5], 4
      %s38 = int_to_ptr.vmem [resolvable:$true] %s37
      %40 = dma.hbm_to_vmem [thread:$0]  %s2, 32, %s38, [#allocation6]
    $region13: #{tpu_custom_call.1} parent=1 // pred_fallthru
      _
    // Predicated region
    $region14: #{tpu_custom_call.1} parent=1 // pred_check
      _
    $region15: #{tpu_custom_call.1} parent=1 // pred_check_branch
      %42 = sbr.rel (0) target = $region17
    $region16: #{tpu_custom_call.1} parent=1 // pred_region
      _
    $region17: #{tpu_custom_call.1} parent=1 // pred_fallthru
      _
    // Predicated region
    $region18: #{tpu_custom_call.1} parent=1 // pred_check
      _
    $region19: #{tpu_custom_call.1} parent=1 // pred_check_branch
      %44 = sbr.rel (0) target = $region21
    $region20: #{tpu_custom_call.1} parent=1 // pred_region
      %s46 = ssub.s32 4096, 4096
      %47 = vsyncadd [#allocation6], %s46
      %s48 = sshll.u32 [#allocation7], 4
      %s49 = int_to_ptr.vmem [resolvable:$true] %s48
      %54 = dma.hbm_to_vmem [thread:$0]  %s4, 4096, %s49, [#allocation6], 64, 64, 4
    $region21: #{tpu_custom_call.1} parent=1 // pred_fallthru
      _
    // Predicated region
    $region22: #{tpu_custom_call.1} parent=1 // pred_check
      _
    $region23: #{tpu_custom_call.1} parent=1 // pred_check_branch
      %56 = sbr.rel (0) target = $region25
    $region24: #{tpu_custom_call.1} parent=1 // pred_region
      _
    $region25: #{tpu_custom_call.1} parent=1 // pred_fallthru
      _
    // Predicated region
    $region26: #{tpu_custom_call.1} parent=1 // pred_check
      _
    $region27: #{tpu_custom_call.1} parent=1 // pred_check_branch
      %58 = sbr.rel (0) target = $region29
    $region28: #{tpu_custom_call.1} parent=1 // pred_region
      %s60 = ssub.s32 8192, 8192
      %61 = vsyncadd [#allocation9], %s60
      %s62 = sshll.u32 [#allocation8], 4
      %s63 = int_to_ptr.vmem [resolvable:$true] %s62
      %68 = dma.hbm_to_vmem [thread:$0]  %s6, 8192, %s63, [#allocation9], 64, 64, 4
    $region29: #{tpu_custom_call.1} parent=1 // pred_fallthru
      _
    // Predicated region
    $region30: #{tpu_custom_call.1} parent=1 // pred_check
      _
    $region31: #{tpu_custom_call.1} parent=1 // pred_check_branch
      %70 = sbr.rel (0) target = $region33
    $region32: #{tpu_custom_call.1} parent=1 // pred_region
      _
    $region33: #{tpu_custom_call.1} parent=1 // pred_fallthru
      _
    // Predicated region
    $region34: #{tpu_custom_call.1} parent=1 // pred_check
      _
    $region35: #{tpu_custom_call.1} parent=1 // pred_check_branch
      %72 = sbr.rel (0) target = $region37
    $region36: #{tpu_custom_call.1} parent=1 // pred_region
      %73 = dma.done [#allocation3], 128
    $region37: #{tpu_custom_call.1} parent=1 // pred_fallthru
      _
    // Predicated region
    $region38: #{tpu_custom_call.1} parent=1 // pred_check
      _
    $region39: #{tpu_custom_call.1} parent=1 // pred_check_branch
      %75 = sbr.rel (0) target = $region41
    $region40: #{tpu_custom_call.1} parent=1 // pred_region
      %76 = dma.done [#allocation6], 32
    $region41: #{tpu_custom_call.1} parent=1 // pred_fallthru
      _
    // Predicated region
    $region42: #{tpu_custom_call.1} parent=1 // pred_check
      _
    $region43: #{tpu_custom_call.1} parent=1 // pred_check_branch
      %78 = sbr.rel (0) target = $region45
    $region44: #{tpu_custom_call.1} parent=1 // pred_region
      %79 = dma.done [#allocation6], 4096
    $region45: #{tpu_custom_call.1} parent=1 // pred_fallthru
      _
    // Predicated region
    $region46: #{tpu_custom_call.1} parent=1 // pred_check
      _
    $region47: #{tpu_custom_call.1} parent=1 // pred_check_branch
      %81 = sbr.rel (0) target = $region49
    $region48: #{tpu_custom_call.1} parent=1 // pred_region
      %82 = dma.done [#allocation9], 8192
    $region49: #{tpu_custom_call.1} parent=1 // pred_fallthru
      _
    %v84 = vld [vmem:[#allocation2] sm:$0xf]
    %v85 = vld [vmem:[#allocation2 + $0x4] sm:$0x3]
    %v86 = vld [vmem:[%s0] sm:$0xff]
    %v87 = vld [vmem:[%s0 + $0x8] sm:$0xf]
    %v88 = vld [vmem:[%s5] sm:$0xff]
    %v89 = vld [vmem:[%s7] sm:$0xff]
    %v90 = vld [vmem:[#allocation7] sm:$0xf]
    %v91 = vld [vmem:[#allocation7 + $0x4] sm:$0xf]
    %v92 = vld [vmem:[#allocation7 + $0x8] sm:$0xf]
    %v93 = vld [vmem:[#allocation7 + $0xc] sm:$0xf]
    %v94 = vld [vmem:[#allocation7 + $0x10] sm:$0xf]
    %v95 = vld [vmem:[#allocation7 + $0x14] sm:$0xf]
    %v96 = vld [vmem:[#allocation7 + $0x18] sm:$0xf]
    %v97 = vld [vmem:[#allocation7 + $0x1c] sm:$0xf]
    %v98 = vld [vmem:[#allocation7 + $0x20] sm:$0xf]
    %v99 = vld [vmem:[#allocation7 + $0x24] sm:$0xf]
    %v100 = vld [vmem:[#allocation7 + $0x28] sm:$0xf]
    %v101 = vld [vmem:[#allocation7 + $0x2c] sm:$0xf]
    %v102 = vld [vmem:[#allocation7 + $0x30] sm:$0xf]
    %v103 = vld [vmem:[#allocation7 + $0x34] sm:$0xf]
    %v104 = vld [vmem:[#allocation7 + $0x38] sm:$0xf]
    %v105 = vld [vmem:[#allocation7 + $0x3c] sm:$0xf]
    %s106 = scalar_lea.vmem [#allocation7], 64
    %v107 = vld [vmem:[%s106] sm:$0xf]
    %v108 = vld [vmem:[%s106 + $0x4] sm:$0xf]
    %v109 = vld [vmem:[%s106 + $0x8] sm:$0xf]
    %v110 = vld [vmem:[%s106 + $0xc] sm:$0xf]
    %v111 = vld [vmem:[%s106 + $0x10] sm:$0xf]
    %v112 = vld [vmem:[%s106 + $0x14] sm:$0xf]
    %v113 = vld [vmem:[%s106 + $0x18] sm:$0xf]
    %v114 = vld [vmem:[%s106 + $0x1c] sm:$0xf]
    %v115 = vld [vmem:[%s106 + $0x20] sm:$0xf]
    %v116 = vld [vmem:[%s106 + $0x24] sm:$0xf]
    %v117 = vld [vmem:[%s106 + $0x28] sm:$0xf]
    %v118 = vld [vmem:[%s106 + $0x2c] sm:$0xf]
    %v119 = vld [vmem:[%s106 + $0x30] sm:$0xf]
    %v120 = vld [vmem:[%s106 + $0x34] sm:$0xf]
    %v121 = vld [vmem:[%s106 + $0x38] sm:$0xf]
    %v122 = vld [vmem:[%s106 + $0x3c] sm:$0xf]
    %v123 = vpack.c.bf16 %v87, %v86
    %v126 = vunpack.c.l.b16 %v84
    %v127 = vunpack.c.l.b16 %v85
    %v128 = vpack.c.b16 %v127, %v126
    %vm129 = vcmask 97280
    %v131 = vsel %vm129, %v128, 0
    %vm133 = vcmask 1045504
    %v135 = vsel %vm133, %v123, 0
    %137 = vmatprep.subr.bf16.mxu0 0
    %138 = vmatpush1.bf16.msra.mxu0 0
    %139 = vmatprep.subr.bf16.mxu0 0
    %140 = vmatpush1.bf16.msra.mxu0 0
    %141 = vmatprep.subr.bf16.mxu0 0
    %142 = vmatpush1.bf16.msra.mxu0 0
    %143 = vmatprep.subr.bf16.mxu0 0
    %144 = vmatpush1.bf16.msra.mxu0 0
    %145 = vmatprep.subr.bf16.mxu0 0
    %146 = vmatpush1.bf16.msra.mxu0 0
    %147 = vmatprep.subr.bf16.mxu0 0
    %148 = vmatpush1.bf16.msra.mxu0 0
    %149 = vmatprep.subr.bf16.mxu0 0
    %150 = vmatpush1.bf16.msra.mxu0 0
    %151 = vmatprep.subr.bf16.mxu0 0
    %152 = vmatpush1.bf16.msra.mxu0 %v135
    %153 = vmatprep.subr.bf16.mxu0 0
    %154 = vmatpush2.bf16.msra.mxu0 0
    %155 = vmatprep.subr.bf16.mxu0 0
    %156 = vmatpush2.bf16.msra.mxu0 0
    %157 = vmatprep.subr.bf16.mxu0 0
    %158 = vmatpush2.bf16.msra.mxu0 0
    %159 = vmatprep.subr.bf16.mxu0 0
    %160 = vmatpush2.bf16.msra.mxu0 0
    %161 = vmatprep.subr.bf16.mxu0 0
    %162 = vmatpush2.bf16.msra.mxu0 0
    %163 = vmatprep.subr.bf16.mxu0 0
    %164 = vmatpush2.bf16.msra.mxu0 0
    %165 = vmatprep.subr.bf16.mxu0 0
    %166 = vmatpush2.bf16.msra.mxu0 0
    %167 = vmatprep.subr.bf16.mxu0 0
    %168 = vmatpush2.bf16.msra.mxu0 0
    %169 = vmatprep.mubr.bf16.mxu0 0
    %170 = vmatmul.mubr.bf16.gmra.mxu0 %v131
    %v171 = vpop.f32.mrf.mxu0
    %v172 = vadd.f32 0.0, %v171
    %v173 = vpop.f32.mrf.mxu0
    %v174 = vpop.f32.mrf.mxu0
    %v175 = vadd.f32 0.0, %v174
    %v176 = vpop.f32.mrf.mxu0
    %177 = vdwg.mxu0
    %v178 = vpack.c.bf16 %v175, %v172
    %v179 = vlaneseq
    %v180 = vshrl.u32 %v179, 7
    %v181 = vsub.s32 0, %v180
    %v182 = vrot.slane %v88, %v181
    %v199 = vunpack.c.l.b16 %v90
    %v200 = vunpack.c.l.b16 %v91
    %v201 = vunpack.c.l.b16 %v92
    %v202 = vunpack.c.l.b16 %v93
    %v203 = vunpack.c.l.b16 %v94
    %v204 = vunpack.c.l.b16 %v95
    %v205 = vunpack.c.l.b16 %v96
    %v206 = vunpack.c.l.b16 %v97
    %v207 = vunpack.c.l.b16 %v98
    %v208 = vunpack.c.l.b16 %v99
    %v209 = vunpack.c.l.b16 %v100
    %v210 = vunpack.c.l.b16 %v101
    %v211 = vunpack.c.l.b16 %v102
    %v212 = vunpack.c.l.b16 %v103
    %v213 = vunpack.c.l.b16 %v104
    %v214 = vunpack.c.l.b16 %v105
    %v215 = vpack.c.b16 %v200, %v199
    %v216 = vpack.c.b16 %v202, %v201
    %v217 = vpack.c.b16 %v204, %v203
    %v218 = vpack.c.b16 %v206, %v205
    %v219 = vpack.c.b16 %v208, %v207
    %v220 = vpack.c.b16 %v210, %v209
    %v221 = vpack.c.b16 %v212, %v211
    %v222 = vpack.c.b16 %v214, %v213
    %231 = vmatprep.subr.bf16.mxu0 0
    %232 = vmatpush1.bf16.msra.mxu0 %v222
    %233 = vmatprep.subr.bf16.mxu0 0
    %234 = vmatpush1.bf16.msra.mxu0 %v221
    %235 = vmatprep.subr.bf16.mxu0 0
    %236 = vmatpush1.bf16.msra.mxu0 %v220
    %237 = vmatprep.subr.bf16.mxu0 0
    %238 = vmatpush1.bf16.msra.mxu0 %v219
    %239 = vmatprep.subr.bf16.mxu0 0
    %240 = vmatpush1.bf16.msra.mxu0 %v218
    %241 = vmatprep.subr.bf16.mxu0 0
    %242 = vmatpush1.bf16.msra.mxu0 %v217
    %243 = vmatprep.subr.bf16.mxu0 0
    %244 = vmatpush1.bf16.msra.mxu0 %v216
    %245 = vmatprep.subr.bf16.mxu0 0
    %246 = vmatpush1.bf16.msra.mxu0 %v215
    %247 = vmatprep.subr.bf16.mxu0 0
    %248 = vmatpush2.bf16.msra.mxu0 0
    %249 = vmatprep.subr.bf16.mxu0 0
    %250 = vmatpush2.bf16.msra.mxu0 0
    %251 = vmatprep.subr.bf16.mxu0 0
    %252 = vmatpush2.bf16.msra.mxu0 0
    %253 = vmatprep.subr.bf16.mxu0 0
    %254 = vmatpush2.bf16.msra.mxu0 0
    %255 = vmatprep.subr.bf16.mxu0 0
    %256 = vmatpush2.bf16.msra.mxu0 0
    %257 = vmatprep.subr.bf16.mxu0 0
    %258 = vmatpush2.bf16.msra.mxu0 0
    %259 = vmatprep.subr.bf16.mxu0 0
    %260 = vmatpush2.bf16.msra.mxu0 0
    %261 = vmatprep.subr.bf16.mxu0 0
    %262 = vmatpush2.bf16.msra.mxu0 0
    %263 = vmatprep.mubr.bf16.mxu0 0
    %264 = vmatmul.mubr.bf16.gmra.mxu0 %v178
    %v265 = vpop.f32.mrf.mxu0
    %v266 = vadd.f32 %v182, %v265
    %v267 = vpop.f32.mrf.mxu0
    %v268 = vpop.f32.mrf.mxu0
    %v269 = vadd.f32 %v182, %v268
    %v270 = vpop.f32.mrf.mxu0
    %271 = vdwg.mxu0
    %v272 = vmax.f32 %v266, 0.0
    %v273 = vmax.f32 %v269, 0.0
    %v274 = vpack.c.bf16 %v273, %v272
    %v275 = vlaneseq
    %v276 = vshrl.u32 %v275, 7
    %v277 = vsub.s32 1, %v276
    %v278 = vrot.slane %v88, %v277
    %v295 = vunpack.c.l.b16 %v107
    %v296 = vunpack.c.l.b16 %v108
    %v297 = vunpack.c.l.b16 %v109
    %v298 = vunpack.c.l.b16 %v110
    %v299 = vunpack.c.l.b16 %v111
    %v300 = vunpack.c.l.b16 %v112
    %v301 = vunpack.c.l.b16 %v113
    %v302 = vunpack.c.l.b16 %v114
    %v303 = vunpack.c.l.b16 %v115
    %v304 = vunpack.c.l.b16 %v116
    %v305 = vunpack.c.l.b16 %v117
    %v306 = vunpack.c.l.b16 %v118
    %v307 = vunpack.c.l.b16 %v119
    %v308 = vunpack.c.l.b16 %v120
    %v309 = vunpack.c.l.b16 %v121
    %v310 = vunpack.c.l.b16 %v122
    %v311 = vpack.c.b16 %v296, %v295
    %v312 = vpack.c.b16 %v298, %v297
    %v313 = vpack.c.b16 %v300, %v299
    %v314 = vpack.c.b16 %v302, %v301
    %v315 = vpack.c.b16 %v304, %v303
    %v316 = vpack.c.b16 %v306, %v305
    %v317 = vpack.c.b16 %v308, %v307
    %v318 = vpack.c.b16 %v310, %v309
    %327 = vmatprep.subr.bf16.mxu0 0
    %328 = vmatpush1.bf16.msra.mxu0 %v318
    %329 = vmatprep.subr.bf16.mxu0 0
    %330 = vmatpush1.bf16.msra.mxu0 %v317
    %331 = vmatprep.subr.bf16.mxu0 0
    %332 = vmatpush1.bf16.msra.mxu0 %v316
    %333 = vmatprep.subr.bf16.mxu0 0
    %334 = vmatpush1.bf16.msra.mxu0 %v315
    %335 = vmatprep.subr.bf16.mxu0 0
    %336 = vmatpush1.bf16.msra.mxu0 %v314
    %337 = vmatprep.subr.bf16.mxu0 0
    %338 = vmatpush1.bf16.msra.mxu0 %v313
    %339 = vmatprep.subr.bf16.mxu0 0
    %340 = vmatpush1.bf16.msra.mxu0 %v312
    %341 = vmatprep.subr.bf16.mxu0 0
    %342 = vmatpush1.bf16.msra.mxu0 %v311
    %343 = vmatprep.subr.bf16.mxu0 0
    %344 = vmatpush2.bf16.msra.mxu0 0
    %345 = vmatprep.subr.bf16.mxu0 0
    %346 = vmatpush2.bf16.msra.mxu0 0
    %347 = vmatprep.subr.bf16.mxu0 0
    %348 = vmatpush2.bf16.msra.mxu0 0
    %349 = vmatprep.subr.bf16.mxu0 0
    %350 = vmatpush2.bf16.msra.mxu0 0
    %351 = vmatprep.subr.bf16.mxu0 0
    %352 = vmatpush2.bf16.msra.mxu0 0
    %353 = vmatprep.subr.bf16.mxu0 0
    %354 = vmatpush2.bf16.msra.mxu0 0
    %355 = vmatprep.subr.bf16.mxu0 0
    %356 = vmatpush2.bf16.msra.mxu0 0
    %357 = vmatprep.subr.bf16.mxu0 0
    %358 = vmatpush2.bf16.msra.mxu0 0
    %359 = vmatprep.mubr.bf16.mxu0 0
    %360 = vmatmul.mubr.bf16.gmra.mxu0 %v274
    %v361 = vpop.f32.mrf.mxu0
    %v362 = vadd.f32 %v278, %v361
    %v363 = vpop.f32.mrf.mxu0
    %v364 = vpop.f32.mrf.mxu0
    %v365 = vadd.f32 %v278, %v364
    %v366 = vpop.f32.mrf.mxu0
    %367 = vdwg.mxu0
    %v368 = vmax.f32 %v362, 0.0
    %v369 = vmax.f32 %v365, 0.0
    %vm370 = vcmask 1043456
    %v371 = vsel %vm370, %v369, 0.0
    %v372 = vadd.f32 %v368, %v371
    %v373 = vrot.slane %v372, 4
    %v374 = vadd.f32 %v372, %v373
    %v375 = vrot.slane %v374, 2
    %v376 = vadd.f32 %v374, %v375
    %v377 = vrot.slane %v376, 1
    %v378 = vadd.f32 %v376, %v377
    %v379 = vrcp.pop 12.0
    %v380 = vmul.f32 %v378, %v379
    %v381 = vmul.f32 %v368, %v368
    %v382 = vmul.f32 %v369, %v369
    %v383 = vsel %vm370, %v382, 0.0
    %v384 = vadd.f32 %v381, %v383
    %v385 = vrot.slane %v384, 4
    %v386 = vadd.f32 %v384, %v385
    %v387 = vrot.slane %v386, 2
    %v388 = vadd.f32 %v386, %v387
    %v389 = vrot.slane %v388, 1
    %v390 = vadd.f32 %v388, %v389
    %v391 = vmul.f32 %v390, %v379
    %v392 = vmul.f32 %v380, %v380
    %v393 = vsub.f32 %v391, %v392
    %v394 = vmax.f32 %v393, 0.0
    %v395 = vsub.f32 %v368, %v380
    %v396 = vsub.f32 %v369, %v380
    %v397 = vadd.f32 %v394, 1e-05
    %v398 = vrsqrt.pop %v397
    %v399 = vmul.f32 %v395, %v398
    %v400 = vmul.f32 %v396, %v398
    %v401 = vlaneseq
    %v402 = vshrl.u32 %v401, 7
    %v403 = vsub.s32 2, %v402
    %v404 = vrot.slane %v88, %v403
    %v405 = vmul.f32 %v404, %v399
    %v406 = vmul.f32 %v404, %v400
    %v407 = vlaneseq
    %v408 = vshrl.u32 %v407, 7
    %v409 = vsub.s32 3, %v408
    %v410 = vrot.slane %v88, %v409
    %v411 = vadd.f32 %v405, %v410
    %v412 = vadd.f32 %v406, %v410
    %v413 = vadd.f32 %v411, 0.0
    %v414 = vadd.f32 %v412, 0.0
    %s415 = scalar_lea.vmem [#allocation7], 128
    %v416 = vld [vmem:[%s415] sm:$0xf]
    %v417 = vld [vmem:[%s415 + $0x4] sm:$0xf]
    %v418 = vld [vmem:[%s415 + $0x8] sm:$0xf]
    %v419 = vld [vmem:[%s415 + $0xc] sm:$0xf]
    %v420 = vld [vmem:[%s415 + $0x10] sm:$0xf]
    %v421 = vld [vmem:[%s415 + $0x14] sm:$0xf]
    %v422 = vld [vmem:[%s415 + $0x18] sm:$0xf]
    %v423 = vld [vmem:[%s415 + $0x1c] sm:$0xf]
    %v424 = vld [vmem:[%s415 + $0x20] sm:$0xf]
    %v425 = vld [vmem:[%s415 + $0x24] sm:$0xf]
    %v426 = vld [vmem:[%s415 + $0x28] sm:$0xf]
    %v427 = vld [vmem:[%s415 + $0x2c] sm:$0xf]
    %v428 = vld [vmem:[%s415 + $0x30] sm:$0xf]
    %v429 = vld [vmem:[%s415 + $0x34] sm:$0xf]
    %v430 = vld [vmem:[%s415 + $0x38] sm:$0xf]
    %v431 = vld [vmem:[%s415 + $0x3c] sm:$0xf]
    %s432 = scalar_lea.vmem [#allocation7], 192
    %v433 = vld [vmem:[%s432] sm:$0xf]
    %v434 = vld [vmem:[%s432 + $0x4] sm:$0xf]
    %v435 = vld [vmem:[%s432 + $0x8] sm:$0xf]
    %v436 = vld [vmem:[%s432 + $0xc] sm:$0xf]
    %v437 = vld [vmem:[%s432 + $0x10] sm:$0xf]
    %v438 = vld [vmem:[%s432 + $0x14] sm:$0xf]
    %v439 = vld [vmem:[%s432 + $0x18] sm:$0xf]
    %v440 = vld [vmem:[%s432 + $0x1c] sm:$0xf]
    %v441 = vld [vmem:[%s432 + $0x20] sm:$0xf]
    %v442 = vld [vmem:[%s432 + $0x24] sm:$0xf]
    %v443 = vld [vmem:[%s432 + $0x28] sm:$0xf]
    %v444 = vld [vmem:[%s432 + $0x2c] sm:$0xf]
    %v445 = vld [vmem:[%s432 + $0x30] sm:$0xf]
    %v446 = vld [vmem:[%s432 + $0x34] sm:$0xf]
    %v447 = vld [vmem:[%s432 + $0x38] sm:$0xf]
    %v448 = vld [vmem:[%s432 + $0x3c] sm:$0xf]
    %v449 = vpack.c.bf16 %v412, %v411
    %v451 = vsel %vm133, %v449, 0
    %453 = vmatprep.subr.bf16.mxu0 0
    %454 = vmatpush1.bf16.msra.mxu0 0
    %455 = vmatprep.subr.bf16.mxu0 0
    %456 = vmatpush1.bf16.msra.mxu0 0
    %457 = vmatprep.subr.bf16.mxu0 0
    %458 = vmatpush1.bf16.msra.mxu0 0
    %459 = vmatprep.subr.bf16.mxu0 0
    %460 = vmatpush1.bf16.msra.mxu0 0
    %461 = vmatprep.subr.bf16.mxu0 0
    %462 = vmatpush1.bf16.msra.mxu0 0
    %463 = vmatprep.subr.bf16.mxu0 0
    %464 = vmatpush1.bf16.msra.mxu0 0
    %465 = vmatprep.subr.bf16.mxu0 0
    %466 = vmatpush1.bf16.msra.mxu0 0
    %467 = vmatprep.subr.bf16.mxu0 0
    %468 = vmatpush1.bf16.msra.mxu0 %v451
    %469 = vmatprep.subr.bf16.mxu0 0
    %470 = vmatpush2.bf16.msra.mxu0 0
    %471 = vmatprep.subr.bf16.mxu0 0
    %472 = vmatpush2.bf16.msra.mxu0 0
    %473 = vmatprep.subr.bf16.mxu0 0
    %474 = vmatpush2.bf16.msra.mxu0 0
    %475 = vmatprep.subr.bf16.mxu0 0
    %476 = vmatpush2.bf16.msra.mxu0 0
    %477 = vmatprep.subr.bf16.mxu0 0
    %478 = vmatpush2.bf16.msra.mxu0 0
    %479 = vmatprep.subr.bf16.mxu0 0
    %480 = vmatpush2.bf16.msra.mxu0 0
    %481 = vmatprep.subr.bf16.mxu0 0
    %482 = vmatpush2.bf16.msra.mxu0 0
    %483 = vmatprep.subr.bf16.mxu0 0
    %484 = vmatpush2.bf16.msra.mxu0 0
    %485 = vmatprep.mubr.bf16.mxu0 0
    %486 = vmatmul.mubr.bf16.gmra.mxu0 %v131
    %v487 = vpop.f32.mrf.mxu0
    %v488 = vadd.f32 0.0, %v487
    %v489 = vpop.f32.mrf.mxu0
    %v490 = vpop.f32.mrf.mxu0
    %v491 = vadd.f32 0.0, %v490
    %v492 = vpop.f32.mrf.mxu0
    %493 = vdwg.mxu0
    %v494 = vpack.c.bf16 %v491, %v488
    %v495 = vlaneseq
    %v496 = vshrl.u32 %v495, 7
    %v497 = vsub.s32 4, %v496
    %v498 = vrot.slane %v88, %v497
    %v515 = vunpack.c.l.b16 %v416
    %v516 = vunpack.c.l.b16 %v417
    %v517 = vunpack.c.l.b16 %v418
    %v518 = vunpack.c.l.b16 %v419
    %v519 = vunpack.c.l.b16 %v420
    %v520 = vunpack.c.l.b16 %v421
    %v521 = vunpack.c.l.b16 %v422
    %v522 = vunpack.c.l.b16 %v423
    %v523 = vunpack.c.l.b16 %v424
    %v524 = vunpack.c.l.b16 %v425
    %v525 = vunpack.c.l.b16 %v426
    %v526 = vunpack.c.l.b16 %v427
    %v527 = vunpack.c.l.b16 %v428
    %v528 = vunpack.c.l.b16 %v429
    %v529 = vunpack.c.l.b16 %v430
    %v530 = vunpack.c.l.b16 %v431
    %v531 = vpack.c.b16 %v516, %v515
    %v532 = vpack.c.b16 %v518, %v517
    %v533 = vpack.c.b16 %v520, %v519
    %v534 = vpack.c.b16 %v522, %v521
    %v535 = vpack.c.b16 %v524, %v523
    %v536 = vpack.c.b16 %v526, %v525
    %v537 = vpack.c.b16 %v528, %v527
    %v538 = vpack.c.b16 %v530, %v529
    %547 = vmatprep.subr.bf16.mxu0 0
    %548 = vmatpush1.bf16.msra.mxu0 %v538
    %549 = vmatprep.subr.bf16.mxu0 0
    %550 = vmatpush1.bf16.msra.mxu0 %v537
    %551 = vmatprep.subr.bf16.mxu0 0
    %552 = vmatpush1.bf16.msra.mxu0 %v536
    %553 = vmatprep.subr.bf16.mxu0 0
    %554 = vmatpush1.bf16.msra.mxu0 %v535
    %555 = vmatprep.subr.bf16.mxu0 0
    %556 = vmatpush1.bf16.msra.mxu0 %v534
    %557 = vmatprep.subr.bf16.mxu0 0
    %558 = vmatpush1.bf16.msra.mxu0 %v533
    %559 = vmatprep.subr.bf16.mxu0 0
    %560 = vmatpush1.bf16.msra.mxu0 %v532
    %561 = vmatprep.subr.bf16.mxu0 0
    %562 = vmatpush1.bf16.msra.mxu0 %v531
    %563 = vmatprep.subr.bf16.mxu0 0
    %564 = vmatpush2.bf16.msra.mxu0 0
    %565 = vmatprep.subr.bf16.mxu0 0
    %566 = vmatpush2.bf16.msra.mxu0 0
    %567 = vmatprep.subr.bf16.mxu0 0
    %568 = vmatpush2.bf16.msra.mxu0 0
    %569 = vmatprep.subr.bf16.mxu0 0
    %570 = vmatpush2.bf16.msra.mxu0 0
    %571 = vmatprep.subr.bf16.mxu0 0
    %572 = vmatpush2.bf16.msra.mxu0 0
    %573 = vmatprep.subr.bf16.mxu0 0
    %574 = vmatpush2.bf16.msra.mxu0 0
    %575 = vmatprep.subr.bf16.mxu0 0
    %576 = vmatpush2.bf16.msra.mxu0 0
    %577 = vmatprep.subr.bf16.mxu0 0
    %578 = vmatpush2.bf16.msra.mxu0 0
    %579 = vmatprep.mubr.bf16.mxu0 0
    %580 = vmatmul.mubr.bf16.gmra.mxu0 %v494
    %v581 = vpop.f32.mrf.mxu0
    %v582 = vadd.f32 %v498, %v581
    %v583 = vpop.f32.mrf.mxu0
    %v584 = vpop.f32.mrf.mxu0
    %v585 = vadd.f32 %v498, %v584
    %v586 = vpop.f32.mrf.mxu0
    %587 = vdwg.mxu0
    %v588 = vmax.f32 %v582, 0.0
    %v589 = vmax.f32 %v585, 0.0
    %v590 = vpack.c.bf16 %v589, %v588
    %v591 = vlaneseq
    %v592 = vshrl.u32 %v591, 7
    %v593 = vsub.s32 5, %v592
    %v594 = vrot.slane %v88, %v593
    %v611 = vunpack.c.l.b16 %v433
    %v612 = vunpack.c.l.b16 %v434
    %v613 = vunpack.c.l.b16 %v435
    %v614 = vunpack.c.l.b16 %v436
    %v615 = vunpack.c.l.b16 %v437
    %v616 = vunpack.c.l.b16 %v438
    %v617 = vunpack.c.l.b16 %v439
    %v618 = vunpack.c.l.b16 %v440
    %v619 = vunpack.c.l.b16 %v441
    %v620 = vunpack.c.l.b16 %v442
    %v621 = vunpack.c.l.b16 %v443
    %v622 = vunpack.c.l.b16 %v444
    %v623 = vunpack.c.l.b16 %v445
    %v624 = vunpack.c.l.b16 %v446
    %v625 = vunpack.c.l.b16 %v447
    %v626 = vunpack.c.l.b16 %v448
    %v627 = vpack.c.b16 %v612, %v611
    %v628 = vpack.c.b16 %v614, %v613
    %v629 = vpack.c.b16 %v616, %v615
    %v630 = vpack.c.b16 %v618, %v617
    %v631 = vpack.c.b16 %v620, %v619
    %v632 = vpack.c.b16 %v622, %v621
    %v633 = vpack.c.b16 %v624, %v623
    %v634 = vpack.c.b16 %v626, %v625
    %643 = vmatprep.subr.bf16.mxu0 0
    %644 = vmatpush1.bf16.msra.mxu0 %v634
    %645 = vmatprep.subr.bf16.mxu0 0
    %646 = vmatpush1.bf16.msra.mxu0 %v633
    %647 = vmatprep.subr.bf16.mxu0 0
    %648 = vmatpush1.bf16.msra.mxu0 %v632
    %649 = vmatprep.subr.bf16.mxu0 0
    %650 = vmatpush1.bf16.msra.mxu0 %v631
    %651 = vmatprep.subr.bf16.mxu0 0
    %652 = vmatpush1.bf16.msra.mxu0 %v630
    %653 = vmatprep.subr.bf16.mxu0 0
    %654 = vmatpush1.bf16.msra.mxu0 %v629
    %655 = vmatprep.subr.bf16.mxu0 0
    %656 = vmatpush1.bf16.msra.mxu0 %v628
    %657 = vmatprep.subr.bf16.mxu0 0
    %658 = vmatpush1.bf16.msra.mxu0 %v627
    %659 = vmatprep.subr.bf16.mxu0 0
    %660 = vmatpush2.bf16.msra.mxu0 0
    %661 = vmatprep.subr.bf16.mxu0 0
    %662 = vmatpush2.bf16.msra.mxu0 0
    %663 = vmatprep.subr.bf16.mxu0 0
    %664 = vmatpush2.bf16.msra.mxu0 0
    %665 = vmatprep.subr.bf16.mxu0 0
    %666 = vmatpush2.bf16.msra.mxu0 0
    %667 = vmatprep.subr.bf16.mxu0 0
    %668 = vmatpush2.bf16.msra.mxu0 0
    %669 = vmatprep.subr.bf16.mxu0 0
    %670 = vmatpush2.bf16.msra.mxu0 0
    %671 = vmatprep.subr.bf16.mxu0 0
    %672 = vmatpush2.bf16.msra.mxu0 0
    %673 = vmatprep.subr.bf16.mxu0 0
    %674 = vmatpush2.bf16.msra.mxu0 0
    %675 = vmatprep.mubr.bf16.mxu0 0
    %676 = vmatmul.mubr.bf16.gmra.mxu0 %v590
    %v677 = vpop.f32.mrf.mxu0
    %v678 = vadd.f32 %v594, %v677
    %v679 = vpop.f32.mrf.mxu0
    %v680 = vpop.f32.mrf.mxu0
    %v681 = vadd.f32 %v594, %v680
    %v682 = vpop.f32.mrf.mxu0
    %683 = vdwg.mxu0
    %v684 = vmax.f32 %v678, 0.0
    %v685 = vmax.f32 %v681, 0.0
    %v686 = vsel %vm370, %v685, 0.0
    %v687 = vadd.f32 %v684, %v686
    %v688 = vrot.slane %v687, 4
    %v689 = vadd.f32 %v687, %v688
    %v690 = vrot.slane %v689, 2
    %v691 = vadd.f32 %v689, %v690
    %v692 = vrot.slane %v691, 1
    %v693 = vadd.f32 %v691, %v692
    %v694 = vmul.f32 %v693, %v379
    %v695 = vmul.f32 %v684, %v684
    %v696 = vmul.f32 %v685, %v685
    %v697 = vsel %vm370, %v696, 0.0
    %v698 = vadd.f32 %v695, %v697
    %v699 = vrot.slane %v698, 4
    %v700 = vadd.f32 %v698, %v699
    %v701 = vrot.slane %v700, 2
    %v702 = vadd.f32 %v700, %v701
    %v703 = vrot.slane %v702, 1
    %v704 = vadd.f32 %v702, %v703
    %v705 = vmul.f32 %v704, %v379
    %v706 = vmul.f32 %v694, %v694
    %v707 = vsub.f32 %v705, %v706
    %v708 = vmax.f32 %v707, 0.0
    %v709 = vsub.f32 %v684, %v694
    %v710 = vsub.f32 %v685, %v694
    %v711 = vadd.f32 %v708, 1e-05
    %v712 = vrsqrt.pop %v711
    %v713 = vmul.f32 %v709, %v712
    %v714 = vmul.f32 %v710, %v712
    %v715 = vlaneseq
    %v716 = vshrl.u32 %v715, 7
    %v717 = vsub.s32 6, %v716
    %v718 = vrot.slane %v88, %v717
    %v719 = vmul.f32 %v718, %v713
    %v720 = vmul.f32 %v718, %v714
    %v721 = vlaneseq
    %v722 = vshrl.u32 %v721, 7
    %v723 = vsub.s32 7, %v722
    %v724 = vrot.slane %v88, %v723
    %v725 = vadd.f32 %v719, %v724
    %v726 = vadd.f32 %v720, %v724
    %v727 = vadd.f32 %v413, %v725
    %v728 = vadd.f32 %v414, %v726
    %v729 = vpack.c.bf16 %v728, %v727
    %v730 = vld [vmem:[#allocation5] sm:$0x3]
    %v732 = vsel %vm129, %v730, 0
    %v735 = vsel %vm133, %v729, 0
    %737 = vmatprep.subr.bf16.mxu0 0
    %738 = vmatpush1.bf16.msra.mxu0 0
    %739 = vmatprep.subr.bf16.mxu0 0
    %740 = vmatpush1.bf16.msra.mxu0 0
    %741 = vmatprep.subr.bf16.mxu0 0
    %742 = vmatpush1.bf16.msra.mxu0 0
    %743 = vmatprep.subr.bf16.mxu0 0
    %744 = vmatpush1.bf16.msra.mxu0 0
    %745 = vmatprep.subr.bf16.mxu0 0
    %746 = vmatpush1.bf16.msra.mxu0 0
    %747 = vmatprep.subr.bf16.mxu0 0
    %748 = vmatpush1.bf16.msra.mxu0 0
    %749 = vmatprep.subr.bf16.mxu0 0
    %750 = vmatpush1.bf16.msra.mxu0 0
    %751 = vmatprep.subr.bf16.mxu0 0
    %752 = vmatpush1.bf16.msra.mxu0 %v735
    %753 = vmatprep.subr.bf16.mxu0 0
    %754 = vmatpush2.bf16.msra.mxu0 0
    %755 = vmatprep.subr.bf16.mxu0 0
    %756 = vmatpush2.bf16.msra.mxu0 0
    %757 = vmatprep.subr.bf16.mxu0 0
    %758 = vmatpush2.bf16.msra.mxu0 0
    %759 = vmatprep.subr.bf16.mxu0 0
    %760 = vmatpush2.bf16.msra.mxu0 0
    %761 = vmatprep.subr.bf16.mxu0 0
    %762 = vmatpush2.bf16.msra.mxu0 0
    %763 = vmatprep.subr.bf16.mxu0 0
    %764 = vmatpush2.bf16.msra.mxu0 0
    %765 = vmatprep.subr.bf16.mxu0 0
    %766 = vmatpush2.bf16.msra.mxu0 0
    %767 = vmatprep.subr.bf16.mxu0 0
    %768 = vmatpush2.bf16.msra.mxu0 0
    %769 = vmatprep.mubr.bf16.mxu0 0
    %770 = vmatmul.mubr.bf16.gmra.mxu0 %v732
    %v771 = vpop.f32.mrf.mxu0
    %v772 = vadd.f32 0.0, %v771
    %v773 = vpop.f32.mrf.mxu0
    %v774 = vpop.f32.mrf.mxu0
    %v775 = vpop.f32.mrf.mxu0
    %776 = vdwg.mxu0
    %v777 = vpack.c.bf16 %v772, %v772
    %v778 = vld [vmem:[#allocation8] sm:$0xf]
    %v779 = vld [vmem:[#allocation8 + $0x4] sm:$0xf]
    %v780 = vld [vmem:[#allocation8 + $0x8] sm:$0xf]
    %v781 = vld [vmem:[#allocation8 + $0xc] sm:$0xf]
    %v782 = vld [vmem:[#allocation8 + $0x10] sm:$0xf]
    %v783 = vld [vmem:[#allocation8 + $0x14] sm:$0xf]
    %v784 = vld [vmem:[#allocation8 + $0x18] sm:$0xf]
    %v785 = vld [vmem:[#allocation8 + $0x1c] sm:$0xf]
    %v786 = vld [vmem:[#allocation8 + $0x20] sm:$0xf]
    %v787 = vld [vmem:[#allocation8 + $0x24] sm:$0xf]
    %v788 = vld [vmem:[#allocation8 + $0x28] sm:$0xf]
    %v789 = vld [vmem:[#allocation8 + $0x2c] sm:$0xf]
    %v790 = vld [vmem:[#allocation8 + $0x30] sm:$0xf]
    %v791 = vld [vmem:[#allocation8 + $0x34] sm:$0xf]
    %v792 = vld [vmem:[#allocation8 + $0x38] sm:$0xf]
    %v793 = vld [vmem:[#allocation8 + $0x3c] sm:$0xf]
    %v794 = vlaneseq
    %v795 = vshrl.u32 %v794, 7
    %v796 = vsub.s32 0, %v795
    %v797 = vrot.slane %v89, %v796
    %v814 = vunpack.c.l.b16 %v778
    %v815 = vunpack.c.l.b16 %v779
    %v816 = vunpack.c.l.b16 %v780
    %v817 = vunpack.c.l.b16 %v781
    %v818 = vunpack.c.l.b16 %v782
    %v819 = vunpack.c.l.b16 %v783
    %v820 = vunpack.c.l.b16 %v784
    %v821 = vunpack.c.l.b16 %v785
    %v822 = vunpack.c.l.b16 %v786
    %v823 = vunpack.c.l.b16 %v787
    %v824 = vunpack.c.l.b16 %v788
    %v825 = vunpack.c.l.b16 %v789
    %v826 = vunpack.c.l.b16 %v790
    %v827 = vunpack.c.l.b16 %v791
    %v828 = vunpack.c.l.b16 %v792
    %v829 = vunpack.c.l.b16 %v793
    %v830 = vpack.c.b16 %v815, %v814
    %v831 = vpack.c.b16 %v817, %v816
    %v832 = vpack.c.b16 %v819, %v818
    %v833 = vpack.c.b16 %v821, %v820
    %v834 = vpack.c.b16 %v823, %v822
    %v835 = vpack.c.b16 %v825, %v824
    %v836 = vpack.c.b16 %v827, %v826
    %v837 = vpack.c.b16 %v829, %v828
    %846 = vmatprep.subr.bf16.mxu0 0
    %847 = vmatpush1.bf16.msra.mxu0 %v837
    %848 = vmatprep.subr.bf16.mxu0 0
    %849 = vmatpush1.bf16.msra.mxu0 %v836
    %850 = vmatprep.subr.bf16.mxu0 0
    %851 = vmatpush1.bf16.msra.mxu0 %v835
    %852 = vmatprep.subr.bf16.mxu0 0
    %853 = vmatpush1.bf16.msra.mxu0 %v834
    %854 = vmatprep.subr.bf16.mxu0 0
    %855 = vmatpush1.bf16.msra.mxu0 %v833
    %856 = vmatprep.subr.bf16.mxu0 0
    %857 = vmatpush1.bf16.msra.mxu0 %v832
    %858 = vmatprep.subr.bf16.mxu0 0
    %859 = vmatpush1.bf16.msra.mxu0 %v831
    %860 = vmatprep.subr.bf16.mxu0 0
    %861 = vmatpush1.bf16.msra.mxu0 %v830
    %862 = vmatprep.subr.bf16.mxu0 0
    %863 = vmatpush2.bf16.msra.mxu0 0
    %864 = vmatprep.subr.bf16.mxu0 0
    %865 = vmatpush2.bf16.msra.mxu0 0
    %866 = vmatprep.subr.bf16.mxu0 0
    %867 = vmatpush2.bf16.msra.mxu0 0
    %868 = vmatprep.subr.bf16.mxu0 0
    %869 = vmatpush2.bf16.msra.mxu0 0
    %870 = vmatprep.subr.bf16.mxu0 0
    %871 = vmatpush2.bf16.msra.mxu0 0
    %872 = vmatprep.subr.bf16.mxu0 0
    %873 = vmatpush2.bf16.msra.mxu0 0
    %874 = vmatprep.subr.bf16.mxu0 0
    %875 = vmatpush2.bf16.msra.mxu0 0
    %876 = vmatprep.subr.bf16.mxu0 0
    %877 = vmatpush2.bf16.msra.mxu0 0
    %878 = vmatprep.mubr.bf16.mxu0 0
    %879 = vmatmul.mubr.bf16.gmra.mxu0 %v729
    %v880 = vpop.f32.mrf.mxu0
    %v881 = vadd.f32 %v797, %v880
    %v882 = vpop.f32.mrf.mxu0
    %v883 = vpop.f32.mrf.mxu0
    %v884 = vadd.f32 %v797, %v883
    %v885 = vpop.f32.mrf.mxu0
    %886 = vdwg.mxu0
    %v887 = vmax.f32 %v881, 0.0
    %v888 = vmax.f32 %v884, 0.0
    %v889 = vpack.c.bf16 %v888, %v887
    %s890 = scalar_lea.vmem [#allocation8], 64
    %v891 = vld [vmem:[%s890] sm:$0xf]
    %v892 = vld [vmem:[%s890 + $0x4] sm:$0xf]
    %v893 = vld [vmem:[%s890 + $0x8] sm:$0xf]
    %v894 = vld [vmem:[%s890 + $0xc] sm:$0xf]
    %v895 = vld [vmem:[%s890 + $0x10] sm:$0xf]
    %v896 = vld [vmem:[%s890 + $0x14] sm:$0xf]
    %v897 = vld [vmem:[%s890 + $0x18] sm:$0xf]
    %v898 = vld [vmem:[%s890 + $0x1c] sm:$0xf]
    %v899 = vld [vmem:[%s890 + $0x20] sm:$0xf]
    %v900 = vld [vmem:[%s890 + $0x24] sm:$0xf]
    %v901 = vld [vmem:[%s890 + $0x28] sm:$0xf]
    %v902 = vld [vmem:[%s890 + $0x2c] sm:$0xf]
    %v903 = vld [vmem:[%s890 + $0x30] sm:$0xf]
    %v904 = vld [vmem:[%s890 + $0x34] sm:$0xf]
    %v905 = vld [vmem:[%s890 + $0x38] sm:$0xf]
    %v906 = vld [vmem:[%s890 + $0x3c] sm:$0xf]
    %v907 = vlaneseq
    %v908 = vshrl.u32 %v907, 7
    %v909 = vsub.s32 1, %v908
    %v910 = vrot.slane %v89, %v909
    %v927 = vunpack.c.l.b16 %v891
    %v928 = vunpack.c.l.b16 %v892
    %v929 = vunpack.c.l.b16 %v893
    %v930 = vunpack.c.l.b16 %v894
    %v931 = vunpack.c.l.b16 %v895
    %v932 = vunpack.c.l.b16 %v896
    %v933 = vunpack.c.l.b16 %v897
    %v934 = vunpack.c.l.b16 %v898
    %v935 = vunpack.c.l.b16 %v899
    %v936 = vunpack.c.l.b16 %v900
    %v937 = vunpack.c.l.b16 %v901
    %v938 = vunpack.c.l.b16 %v902
    %v939 = vunpack.c.l.b16 %v903
    %v940 = vunpack.c.l.b16 %v904
    %v941 = vunpack.c.l.b16 %v905
    %v942 = vunpack.c.l.b16 %v906
    %v943 = vpack.c.b16 %v928, %v927
    %v944 = vpack.c.b16 %v930, %v929
    %v945 = vpack.c.b16 %v932, %v931
    %v946 = vpack.c.b16 %v934, %v933
    %v947 = vpack.c.b16 %v936, %v935
    %v948 = vpack.c.b16 %v938, %v937
    %v949 = vpack.c.b16 %v940, %v939
    %v950 = vpack.c.b16 %v942, %v941
    %959 = vmatprep.subr.bf16.mxu0 0
    %960 = vmatpush1.bf16.msra.mxu0 %v950
    %961 = vmatprep.subr.bf16.mxu0 0
    %962 = vmatpush1.bf16.msra.mxu0 %v949
    %963 = vmatprep.subr.bf16.mxu0 0
    %964 = vmatpush1.bf16.msra.mxu0 %v948
    %965 = vmatprep.subr.bf16.mxu0 0
    %966 = vmatpush1.bf16.msra.mxu0 %v947
    %967 = vmatprep.subr.bf16.mxu0 0
    %968 = vmatpush1.bf16.msra.mxu0 %v946
    %969 = vmatprep.subr.bf16.mxu0 0
    %970 = vmatpush1.bf16.msra.mxu0 %v945
    %971 = vmatprep.subr.bf16.mxu0 0
    %972 = vmatpush1.bf16.msra.mxu0 %v944
    %973 = vmatprep.subr.bf16.mxu0 0
    %974 = vmatpush1.bf16.msra.mxu0 %v943
    %975 = vmatprep.subr.bf16.mxu0 0
    %976 = vmatpush2.bf16.msra.mxu0 0
    %977 = vmatprep.subr.bf16.mxu0 0
    %978 = vmatpush2.bf16.msra.mxu0 0
    %979 = vmatprep.subr.bf16.mxu0 0
    %980 = vmatpush2.bf16.msra.mxu0 0
    %981 = vmatprep.subr.bf16.mxu0 0
    %982 = vmatpush2.bf16.msra.mxu0 0
    %983 = vmatprep.subr.bf16.mxu0 0
    %984 = vmatpush2.bf16.msra.mxu0 0
    %985 = vmatprep.subr.bf16.mxu0 0
    %986 = vmatpush2.bf16.msra.mxu0 0
    %987 = vmatprep.subr.bf16.mxu0 0
    %988 = vmatpush2.bf16.msra.mxu0 0
    %989 = vmatprep.subr.bf16.mxu0 0
    %990 = vmatpush2.bf16.msra.mxu0 0
    %991 = vmatprep.mubr.bf16.mxu0 0
    %992 = vmatmul.mubr.bf16.gmra.mxu0 %v889
    %v993 = vpop.f32.mrf.mxu0
    %v994 = vadd.f32 %v910, %v993
    %v995 = vpop.f32.mrf.mxu0
    %v996 = vpop.f32.mrf.mxu0
    %v997 = vadd.f32 %v910, %v996
    %v998 = vpop.f32.mrf.mxu0
    %999 = vdwg.mxu0
    %v1000 = vmax.f32 %v994, 0.0
    %v1001 = vmax.f32 %v997, 0.0
    %v1002 = vpack.c.bf16 %v1001, %v1000
    %s1003 = scalar_lea.vmem [#allocation8], 128
    %v1004 = vld [vmem:[%s1003] sm:$0xf]
    %v1005 = vld [vmem:[%s1003 + $0x4] sm:$0xf]
    %v1006 = vld [vmem:[%s1003 + $0x8] sm:$0xf]
    %v1007 = vld [vmem:[%s1003 + $0xc] sm:$0xf]
    %v1008 = vld [vmem:[%s1003 + $0x10] sm:$0xf]
    %v1009 = vld [vmem:[%s1003 + $0x14] sm:$0xf]
    %v1010 = vld [vmem:[%s1003 + $0x18] sm:$0xf]
    %v1011 = vld [vmem:[%s1003 + $0x1c] sm:$0xf]
    %v1012 = vld [vmem:[%s1003 + $0x20] sm:$0xf]
    %v1013 = vld [vmem:[%s1003 + $0x24] sm:$0xf]
    %v1014 = vld [vmem:[%s1003 + $0x28] sm:$0xf]
    %v1015 = vld [vmem:[%s1003 + $0x2c] sm:$0xf]
    %v1016 = vld [vmem:[%s1003 + $0x30] sm:$0xf]
    %v1017 = vld [vmem:[%s1003 + $0x34] sm:$0xf]
    %v1018 = vld [vmem:[%s1003 + $0x38] sm:$0xf]
    %v1019 = vld [vmem:[%s1003 + $0x3c] sm:$0xf]
    %v1020 = vlaneseq
    %v1021 = vshrl.u32 %v1020, 7
    %v1022 = vsub.s32 2, %v1021
    %v1023 = vrot.slane %v89, %v1022
    %v1040 = vunpack.c.l.b16 %v1004
    %v1041 = vunpack.c.l.b16 %v1005
    %v1042 = vunpack.c.l.b16 %v1006
    %v1043 = vunpack.c.l.b16 %v1007
    %v1044 = vunpack.c.l.b16 %v1008
    %v1045 = vunpack.c.l.b16 %v1009
    %v1046 = vunpack.c.l.b16 %v1010
    %v1047 = vunpack.c.l.b16 %v1011
    %v1048 = vunpack.c.l.b16 %v1012
    %v1049 = vunpack.c.l.b16 %v1013
    %v1050 = vunpack.c.l.b16 %v1014
    %v1051 = vunpack.c.l.b16 %v1015
    %v1052 = vunpack.c.l.b16 %v1016
    %v1053 = vunpack.c.l.b16 %v1017
    %v1054 = vunpack.c.l.b16 %v1018
    %v1055 = vunpack.c.l.b16 %v1019
    %v1056 = vpack.c.b16 %v1041, %v1040
    %v1057 = vpack.c.b16 %v1043, %v1042
    %v1058 = vpack.c.b16 %v1045, %v1044
    %v1059 = vpack.c.b16 %v1047, %v1046
    %v1060 = vpack.c.b16 %v1049, %v1048
    %v1061 = vpack.c.b16 %v1051, %v1050
    %v1062 = vpack.c.b16 %v1053, %v1052
    %v1063 = vpack.c.b16 %v1055, %v1054
    %1072 = vmatprep.subr.bf16.mxu0 0
    %1073 = vmatpush1.bf16.msra.mxu0 %v1063
    %1074 = vmatprep.subr.bf16.mxu0 0
    %1075 = vmatpush1.bf16.msra.mxu0 %v1062
    %1076 = vmatprep.subr.bf16.mxu0 0
    %1077 = vmatpush1.bf16.msra.mxu0 %v1061
    %1078 = vmatprep.subr.bf16.mxu0 0
    %1079 = vmatpush1.bf16.msra.mxu0 %v1060
    %1080 = vmatprep.subr.bf16.mxu0 0
    %1081 = vmatpush1.bf16.msra.mxu0 %v1059
    %1082 = vmatprep.subr.bf16.mxu0 0
    %1083 = vmatpush1.bf16.msra.mxu0 %v1058
    %1084 = vmatprep.subr.bf16.mxu0 0
    %1085 = vmatpush1.bf16.msra.mxu0 %v1057
    %1086 = vmatprep.subr.bf16.mxu0 0
    %1087 = vmatpush1.bf16.msra.mxu0 %v1056
    %1088 = vmatprep.subr.bf16.mxu0 0
    %1089 = vmatpush2.bf16.msra.mxu0 0
    %1090 = vmatprep.subr.bf16.mxu0 0
    %1091 = vmatpush2.bf16.msra.mxu0 0
    %1092 = vmatprep.subr.bf16.mxu0 0
    %1093 = vmatpush2.bf16.msra.mxu0 0
    %1094 = vmatprep.subr.bf16.mxu0 0
    %1095 = vmatpush2.bf16.msra.mxu0 0
    %1096 = vmatprep.subr.bf16.mxu0 0
    %1097 = vmatpush2.bf16.msra.mxu0 0
    %1098 = vmatprep.subr.bf16.mxu0 0
    %1099 = vmatpush2.bf16.msra.mxu0 0
    %1100 = vmatprep.subr.bf16.mxu0 0
    %1101 = vmatpush2.bf16.msra.mxu0 0
    %1102 = vmatprep.subr.bf16.mxu0 0
    %1103 = vmatpush2.bf16.msra.mxu0 0
    %1104 = vmatprep.mubr.bf16.mxu0 0
    %1105 = vmatmul.mubr.bf16.gmra.mxu0 %v1002
    %v1106 = vpop.f32.mrf.mxu0
    %v1107 = vadd.f32 %v1023, %v1106
    %v1108 = vpop.f32.mrf.mxu0
    %v1109 = vpop.f32.mrf.mxu0
    %v1110 = vadd.f32 %v1023, %v1109
    %v1111 = vpop.f32.mrf.mxu0
    %1112 = vdwg.mxu0
    %v1113 = vmax.f32 %v1107, 0.0
    %v1114 = vmax.f32 %v1110, 0.0
    %s1115 = scalar_lea.vmem [#allocation8], 192
    %v1116 = vld [vmem:[%s1115] sm:$0xf]
    %v1117 = vld [vmem:[%s1115 + $0x4] sm:$0xf]
    %v1118 = vld [vmem:[%s1115 + $0x8] sm:$0xf]
    %v1119 = vld [vmem:[%s1115 + $0xc] sm:$0xf]
    %v1120 = vld [vmem:[%s1115 + $0x10] sm:$0xf]
    %v1121 = vld [vmem:[%s1115 + $0x14] sm:$0xf]
    %v1122 = vld [vmem:[%s1115 + $0x18] sm:$0xf]
    %v1123 = vld [vmem:[%s1115 + $0x1c] sm:$0xf]
    %v1124 = vld [vmem:[%s1115 + $0x20] sm:$0xf]
    %v1125 = vld [vmem:[%s1115 + $0x24] sm:$0xf]
    %v1126 = vld [vmem:[%s1115 + $0x28] sm:$0xf]
    %v1127 = vld [vmem:[%s1115 + $0x2c] sm:$0xf]
    %v1128 = vld [vmem:[%s1115 + $0x30] sm:$0xf]
    %v1129 = vld [vmem:[%s1115 + $0x34] sm:$0xf]
    %v1130 = vld [vmem:[%s1115 + $0x38] sm:$0xf]
    %v1131 = vld [vmem:[%s1115 + $0x3c] sm:$0xf]
    %v1132 = vlaneseq
    %v1133 = vshrl.u32 %v1132, 7
    %v1134 = vsub.s32 3, %v1133
    %v1135 = vrot.slane %v89, %v1134
    %v1152 = vunpack.c.l.b16 %v1116
    %v1153 = vunpack.c.l.b16 %v1117
    %v1154 = vunpack.c.l.b16 %v1118
    %v1155 = vunpack.c.l.b16 %v1119
    %v1156 = vunpack.c.l.b16 %v1120
    %v1157 = vunpack.c.l.b16 %v1121
    %v1158 = vunpack.c.l.b16 %v1122
    %v1159 = vunpack.c.l.b16 %v1123
    %v1160 = vunpack.c.l.b16 %v1124
    %v1161 = vunpack.c.l.b16 %v1125
    %v1162 = vunpack.c.l.b16 %v1126
    %v1163 = vunpack.c.l.b16 %v1127
    %v1164 = vunpack.c.l.b16 %v1128
    %v1165 = vunpack.c.l.b16 %v1129
    %v1166 = vunpack.c.l.b16 %v1130
    %v1167 = vunpack.c.l.b16 %v1131
    %v1168 = vpack.c.b16 %v1153, %v1152
    %v1169 = vpack.c.b16 %v1155, %v1154
    %v1170 = vpack.c.b16 %v1157, %v1156
    %v1171 = vpack.c.b16 %v1159, %v1158
    %v1172 = vpack.c.b16 %v1161, %v1160
    %v1173 = vpack.c.b16 %v1163, %v1162
    %v1174 = vpack.c.b16 %v1165, %v1164
    %v1175 = vpack.c.b16 %v1167, %v1166
    %1184 = vmatprep.subr.bf16.mxu0 0
    %1185 = vmatpush1.bf16.msra.mxu0 %v1175
    %1186 = vmatprep.subr.bf16.mxu0 0
    %1187 = vmatpush1.bf16.msra.mxu0 %v1174
    %1188 = vmatprep.subr.bf16.mxu0 0
    %1189 = vmatpush1.bf16.msra.mxu0 %v1173
    %1190 = vmatprep.subr.bf16.mxu0 0
    %1191 = vmatpush1.bf16.msra.mxu0 %v1172
    %1192 = vmatprep.subr.bf16.mxu0 0
    %1193 = vmatpush1.bf16.msra.mxu0 %v1171
    %1194 = vmatprep.subr.bf16.mxu0 0
    %1195 = vmatpush1.bf16.msra.mxu0 %v1170
    %1196 = vmatprep.subr.bf16.mxu0 0
    %1197 = vmatpush1.bf16.msra.mxu0 %v1169
    %1198 = vmatprep.subr.bf16.mxu0 0
    %1199 = vmatpush1.bf16.msra.mxu0 %v1168
    %1200 = vmatprep.subr.bf16.mxu0 0
    %1201 = vmatpush2.bf16.msra.mxu0 0
    %1202 = vmatprep.subr.bf16.mxu0 0
    %1203 = vmatpush2.bf16.msra.mxu0 0
    %1204 = vmatprep.subr.bf16.mxu0 0
    %1205 = vmatpush2.bf16.msra.mxu0 0
    %1206 = vmatprep.subr.bf16.mxu0 0
    %1207 = vmatpush2.bf16.msra.mxu0 0
    %1208 = vmatprep.subr.bf16.mxu0 0
    %1209 = vmatpush2.bf16.msra.mxu0 0
    %1210 = vmatprep.subr.bf16.mxu0 0
    %1211 = vmatpush2.bf16.msra.mxu0 0
    %1212 = vmatprep.subr.bf16.mxu0 0
    %1213 = vmatpush2.bf16.msra.mxu0 0
    %1214 = vmatprep.subr.bf16.mxu0 0
    %1215 = vmatpush2.bf16.msra.mxu0 0
    %1216 = vmatprep.mubr.bf16.mxu0 0
    %1217 = vmatmul.mubr.bf16.gmra.mxu0 %v729
    %v1218 = vpop.f32.mrf.mxu0
    %v1219 = vadd.f32 %v1135, %v1218
    %v1220 = vpop.f32.mrf.mxu0
    %v1221 = vpop.f32.mrf.mxu0
    %v1222 = vadd.f32 %v1135, %v1221
    %v1223 = vpop.f32.mrf.mxu0
    %1224 = vdwg.mxu0
    %v1225 = vadd.f32 %v1113, %v1219
    %v1226 = vadd.f32 %v1114, %v1222
    %s1227 = scalar_lea.vmem [#allocation8], 256
    %v1228 = vld [vmem:[%s1227] sm:$0xf]
    %v1229 = vld [vmem:[%s1227 + $0x4] sm:$0xf]
    %v1230 = vld [vmem:[%s1227 + $0x8] sm:$0xf]
    %v1231 = vld [vmem:[%s1227 + $0xc] sm:$0xf]
    %v1232 = vld [vmem:[%s1227 + $0x10] sm:$0xf]
    %v1233 = vld [vmem:[%s1227 + $0x14] sm:$0xf]
    %v1234 = vld [vmem:[%s1227 + $0x18] sm:$0xf]
    %v1235 = vld [vmem:[%s1227 + $0x1c] sm:$0xf]
    %v1236 = vld [vmem:[%s1227 + $0x20] sm:$0xf]
    %v1237 = vld [vmem:[%s1227 + $0x24] sm:$0xf]
    %v1238 = vld [vmem:[%s1227 + $0x28] sm:$0xf]
    %v1239 = vld [vmem:[%s1227 + $0x2c] sm:$0xf]
    %v1240 = vld [vmem:[%s1227 + $0x30] sm:$0xf]
    %v1241 = vld [vmem:[%s1227 + $0x34] sm:$0xf]
    %v1242 = vld [vmem:[%s1227 + $0x38] sm:$0xf]
    %v1243 = vld [vmem:[%s1227 + $0x3c] sm:$0xf]
    %v1244 = vlaneseq
    %v1245 = vshrl.u32 %v1244, 7
    %v1246 = vsub.s32 4, %v1245
    %v1247 = vrot.slane %v89, %v1246
    %v1264 = vunpack.c.l.b16 %v1228
    %v1265 = vunpack.c.l.b16 %v1229
    %v1266 = vunpack.c.l.b16 %v1230
    %v1267 = vunpack.c.l.b16 %v1231
    %v1268 = vunpack.c.l.b16 %v1232
    %v1269 = vunpack.c.l.b16 %v1233
    %v1270 = vunpack.c.l.b16 %v1234
    %v1271 = vunpack.c.l.b16 %v1235
    %v1272 = vunpack.c.l.b16 %v1236
    %v1273 = vunpack.c.l.b16 %v1237
    %v1274 = vunpack.c.l.b16 %v1238
    %v1275 = vunpack.c.l.b16 %v1239
    %v1276 = vunpack.c.l.b16 %v1240
    %v1277 = vunpack.c.l.b16 %v1241
    %v1278 = vunpack.c.l.b16 %v1242
    %v1279 = vunpack.c.l.b16 %v1243
    %v1280 = vpack.c.b16 %v1265, %v1264
    %v1281 = vpack.c.b16 %v1267, %v1266
    %v1282 = vpack.c.b16 %v1269, %v1268
    %v1283 = vpack.c.b16 %v1271, %v1270
    %v1284 = vpack.c.b16 %v1273, %v1272
    %v1285 = vpack.c.b16 %v1275, %v1274
    %v1286 = vpack.c.b16 %v1277, %v1276
    %v1287 = vpack.c.b16 %v1279, %v1278
    %1296 = vmatprep.subr.bf16.mxu0 0
    %1297 = vmatpush1.bf16.msra.mxu0 %v1287
    %1298 = vmatprep.subr.bf16.mxu0 0
    %1299 = vmatpush1.bf16.msra.mxu0 %v1286
    %1300 = vmatprep.subr.bf16.mxu0 0
    %1301 = vmatpush1.bf16.msra.mxu0 %v1285
    %1302 = vmatprep.subr.bf16.mxu0 0
    %1303 = vmatpush1.bf16.msra.mxu0 %v1284
    %1304 = vmatprep.subr.bf16.mxu0 0
    %1305 = vmatpush1.bf16.msra.mxu0 %v1283
    %1306 = vmatprep.subr.bf16.mxu0 0
    %1307 = vmatpush1.bf16.msra.mxu0 %v1282
    %1308 = vmatprep.subr.bf16.mxu0 0
    %1309 = vmatpush1.bf16.msra.mxu0 %v1281
    %1310 = vmatprep.subr.bf16.mxu0 0
    %1311 = vmatpush1.bf16.msra.mxu0 %v1280
    %1312 = vmatprep.subr.bf16.mxu0 0
    %1313 = vmatpush2.bf16.msra.mxu0 0
    %1314 = vmatprep.subr.bf16.mxu0 0
    %1315 = vmatpush2.bf16.msra.mxu0 0
    %1316 = vmatprep.subr.bf16.mxu0 0
    %1317 = vmatpush2.bf16.msra.mxu0 0
    %1318 = vmatprep.subr.bf16.mxu0 0
    %1319 = vmatpush2.bf16.msra.mxu0 0
    %1320 = vmatprep.subr.bf16.mxu0 0
    %1321 = vmatpush2.bf16.msra.mxu0 0
    %1322 = vmatprep.subr.bf16.mxu0 0
    %1323 = vmatpush2.bf16.msra.mxu0 0
    %1324 = vmatprep.subr.bf16.mxu0 0
    %1325 = vmatpush2.bf16.msra.mxu0 0
    %1326 = vmatprep.subr.bf16.mxu0 0
    %1327 = vmatpush2.bf16.msra.mxu0 0
    %1328 = vmatprep.mubr.bf16.mxu0 0
    %1329 = vmatmul.mubr.bf16.gmra.mxu0 %v777
    %v1330 = vpop.f32.mrf.mxu0
    %v1331 = vadd.f32 %v1247, %v1330
    %v1332 = vpop.f32.mrf.mxu0
    %v1333 = vpop.f32.mrf.mxu0
    %v1334 = vpop.f32.mrf.mxu0
    %1335 = vdwg.mxu0
    %v1336 = vmax.f32 %v1331, 0.0
    %v1337 = vpack.c.bf16 %v1336, %v1336
    %s1338 = scalar_lea.vmem [#allocation8], 320
    %v1339 = vld [vmem:[%s1338] sm:$0xf]
    %v1340 = vld [vmem:[%s1338 + $0x4] sm:$0xf]
    %v1341 = vld [vmem:[%s1338 + $0x8] sm:$0xf]
    %v1342 = vld [vmem:[%s1338 + $0xc] sm:$0xf]
    %v1343 = vld [vmem:[%s1338 + $0x10] sm:$0xf]
    %v1344 = vld [vmem:[%s1338 + $0x14] sm:$0xf]
    %v1345 = vld [vmem:[%s1338 + $0x18] sm:$0xf]
    %v1346 = vld [vmem:[%s1338 + $0x1c] sm:$0xf]
    %v1347 = vld [vmem:[%s1338 + $0x20] sm:$0xf]
    %v1348 = vld [vmem:[%s1338 + $0x24] sm:$0xf]
    %v1349 = vld [vmem:[%s1338 + $0x28] sm:$0xf]
    %v1350 = vld [vmem:[%s1338 + $0x2c] sm:$0xf]
    %v1351 = vld [vmem:[%s1338 + $0x30] sm:$0xf]
    %v1352 = vld [vmem:[%s1338 + $0x34] sm:$0xf]
    %v1353 = vld [vmem:[%s1338 + $0x38] sm:$0xf]
    %v1354 = vld [vmem:[%s1338 + $0x3c] sm:$0xf]
    %v1355 = vlaneseq
    %v1356 = vshrl.u32 %v1355, 7
    %v1357 = vsub.s32 5, %v1356
    %v1358 = vrot.slane %v89, %v1357
    %v1375 = vunpack.c.l.b16 %v1339
    %v1376 = vunpack.c.l.b16 %v1340
    %v1377 = vunpack.c.l.b16 %v1341
    %v1378 = vunpack.c.l.b16 %v1342
    %v1379 = vunpack.c.l.b16 %v1343
    %v1380 = vunpack.c.l.b16 %v1344
    %v1381 = vunpack.c.l.b16 %v1345
    %v1382 = vunpack.c.l.b16 %v1346
    %v1383 = vunpack.c.l.b16 %v1347
    %v1384 = vunpack.c.l.b16 %v1348
    %v1385 = vunpack.c.l.b16 %v1349
    %v1386 = vunpack.c.l.b16 %v1350
    %v1387 = vunpack.c.l.b16 %v1351
    %v1388 = vunpack.c.l.b16 %v1352
    %v1389 = vunpack.c.l.b16 %v1353
    %v1390 = vunpack.c.l.b16 %v1354
    %v1391 = vpack.c.b16 %v1376, %v1375
    %v1392 = vpack.c.b16 %v1378, %v1377
    %v1393 = vpack.c.b16 %v1380, %v1379
    %v1394 = vpack.c.b16 %v1382, %v1381
    %v1395 = vpack.c.b16 %v1384, %v1383
    %v1396 = vpack.c.b16 %v1386, %v1385
    %v1397 = vpack.c.b16 %v1388, %v1387
    %v1398 = vpack.c.b16 %v1390, %v1389
    %1407 = vmatprep.subr.bf16.mxu0 0
    %1408 = vmatpush1.bf16.msra.mxu0 %v1398
    %1409 = vmatprep.subr.bf16.mxu0 0
    %1410 = vmatpush1.bf16.msra.mxu0 %v1397
    %1411 = vmatprep.subr.bf16.mxu0 0
    %1412 = vmatpush1.bf16.msra.mxu0 %v1396
    %1413 = vmatprep.subr.bf16.mxu0 0
    %1414 = vmatpush1.bf16.msra.mxu0 %v1395
    %1415 = vmatprep.subr.bf16.mxu0 0
    %1416 = vmatpush1.bf16.msra.mxu0 %v1394
    %1417 = vmatprep.subr.bf16.mxu0 0
    %1418 = vmatpush1.bf16.msra.mxu0 %v1393
    %1419 = vmatprep.subr.bf16.mxu0 0
    %1420 = vmatpush1.bf16.msra.mxu0 %v1392
    %1421 = vmatprep.subr.bf16.mxu0 0
    %1422 = vmatpush1.bf16.msra.mxu0 %v1391
    %1423 = vmatprep.subr.bf16.mxu0 0
    %1424 = vmatpush2.bf16.msra.mxu0 0
    %1425 = vmatprep.subr.bf16.mxu0 0
    %1426 = vmatpush2.bf16.msra.mxu0 0
    %1427 = vmatprep.subr.bf16.mxu0 0
    %1428 = vmatpush2.bf16.msra.mxu0 0
    %1429 = vmatprep.subr.bf16.mxu0 0
    %1430 = vmatpush2.bf16.msra.mxu0 0
    %1431 = vmatprep.subr.bf16.mxu0 0
    %1432 = vmatpush2.bf16.msra.mxu0 0
    %1433 = vmatprep.subr.bf16.mxu0 0
    %1434 = vmatpush2.bf16.msra.mxu0 0
    %1435 = vmatprep.subr.bf16.mxu0 0
    %1436 = vmatpush2.bf16.msra.mxu0 0
    %1437 = vmatprep.subr.bf16.mxu0 0
    %1438 = vmatpush2.bf16.msra.mxu0 0
    %1439 = vmatprep.mubr.bf16.mxu0 0
    %1440 = vmatmul.mubr.bf16.gmra.mxu0 %v1337
    %v1441 = vpop.f32.mrf.mxu0
    %v1442 = vadd.f32 %v1358, %v1441
    %v1443 = vpop.f32.mrf.mxu0
    %v1444 = vpop.f32.mrf.mxu0
    %v1445 = vpop.f32.mrf.mxu0
    %1446 = vdwg.mxu0
    %v1447 = vmax.f32 %v1442, 0.0
    %v1448 = vpack.c.bf16 %v1447, %v1447
    %s1449 = scalar_lea.vmem [#allocation8], 384
    %v1450 = vld [vmem:[%s1449] sm:$0xf]
    %v1451 = vld [vmem:[%s1449 + $0x4] sm:$0xf]
    %v1452 = vld [vmem:[%s1449 + $0x8] sm:$0xf]
    %v1453 = vld [vmem:[%s1449 + $0xc] sm:$0xf]
    %v1454 = vld [vmem:[%s1449 + $0x10] sm:$0xf]
    %v1455 = vld [vmem:[%s1449 + $0x14] sm:$0xf]
    %v1456 = vld [vmem:[%s1449 + $0x18] sm:$0xf]
    %v1457 = vld [vmem:[%s1449 + $0x1c] sm:$0xf]
    %v1458 = vld [vmem:[%s1449 + $0x20] sm:$0xf]
    %v1459 = vld [vmem:[%s1449 + $0x24] sm:$0xf]
    %v1460 = vld [vmem:[%s1449 + $0x28] sm:$0xf]
    %v1461 = vld [vmem:[%s1449 + $0x2c] sm:$0xf]
    %v1462 = vld [vmem:[%s1449 + $0x30] sm:$0xf]
    %v1463 = vld [vmem:[%s1449 + $0x34] sm:$0xf]
    %v1464 = vld [vmem:[%s1449 + $0x38] sm:$0xf]
    %v1465 = vld [vmem:[%s1449 + $0x3c] sm:$0xf]
    %v1466 = vlaneseq
    %v1467 = vshrl.u32 %v1466, 7
    %v1468 = vsub.s32 6, %v1467
    %v1469 = vrot.slane %v89, %v1468
    %v1486 = vunpack.c.l.b16 %v1450
    %v1487 = vunpack.c.l.b16 %v1451
    %v1488 = vunpack.c.l.b16 %v1452
    %v1489 = vunpack.c.l.b16 %v1453
    %v1490 = vunpack.c.l.b16 %v1454
    %v1491 = vunpack.c.l.b16 %v1455
    %v1492 = vunpack.c.l.b16 %v1456
    %v1493 = vunpack.c.l.b16 %v1457
    %v1494 = vunpack.c.l.b16 %v1458
    %v1495 = vunpack.c.l.b16 %v1459
    %v1496 = vunpack.c.l.b16 %v1460
    %v1497 = vunpack.c.l.b16 %v1461
    %v1498 = vunpack.c.l.b16 %v1462
    %v1499 = vunpack.c.l.b16 %v1463
    %v1500 = vunpack.c.l.b16 %v1464
    %v1501 = vunpack.c.l.b16 %v1465
    %v1502 = vpack.c.b16 %v1487, %v1486
    %v1503 = vpack.c.b16 %v1489, %v1488
    %v1504 = vpack.c.b16 %v1491, %v1490
    %v1505 = vpack.c.b16 %v1493, %v1492
    %v1506 = vpack.c.b16 %v1495, %v1494
    %v1507 = vpack.c.b16 %v1497, %v1496
    %v1508 = vpack.c.b16 %v1499, %v1498
    %v1509 = vpack.c.b16 %v1501, %v1500
    %1518 = vmatprep.subr.bf16.mxu0 0
    %1519 = vmatpush1.bf16.msra.mxu0 %v1509
    %1520 = vmatprep.subr.bf16.mxu0 0
    %1521 = vmatpush1.bf16.msra.mxu0 %v1508
    %1522 = vmatprep.subr.bf16.mxu0 0
    %1523 = vmatpush1.bf16.msra.mxu0 %v1507
    %1524 = vmatprep.subr.bf16.mxu0 0
    %1525 = vmatpush1.bf16.msra.mxu0 %v1506
    %1526 = vmatprep.subr.bf16.mxu0 0
    %1527 = vmatpush1.bf16.msra.mxu0 %v1505
    %1528 = vmatprep.subr.bf16.mxu0 0
    %1529 = vmatpush1.bf16.msra.mxu0 %v1504
    %1530 = vmatprep.subr.bf16.mxu0 0
    %1531 = vmatpush1.bf16.msra.mxu0 %v1503
    %1532 = vmatprep.subr.bf16.mxu0 0
    %1533 = vmatpush1.bf16.msra.mxu0 %v1502
    %1534 = vmatprep.subr.bf16.mxu0 0
    %1535 = vmatpush2.bf16.msra.mxu0 0
    %1536 = vmatprep.subr.bf16.mxu0 0
    %1537 = vmatpush2.bf16.msra.mxu0 0
    %1538 = vmatprep.subr.bf16.mxu0 0
    %1539 = vmatpush2.bf16.msra.mxu0 0
    %1540 = vmatprep.subr.bf16.mxu0 0
    %1541 = vmatpush2.bf16.msra.mxu0 0
    %1542 = vmatprep.subr.bf16.mxu0 0
    %1543 = vmatpush2.bf16.msra.mxu0 0
    %1544 = vmatprep.subr.bf16.mxu0 0
    %1545 = vmatpush2.bf16.msra.mxu0 0
    %1546 = vmatprep.subr.bf16.mxu0 0
    %1547 = vmatpush2.bf16.msra.mxu0 0
    %1548 = vmatprep.subr.bf16.mxu0 0
    %1549 = vmatpush2.bf16.msra.mxu0 0
    %1550 = vmatprep.mubr.bf16.mxu0 0
    %1551 = vmatmul.mubr.bf16.gmra.mxu0 %v1448
    %v1552 = vpop.f32.mrf.mxu0
    %v1553 = vadd.f32 %v1469, %v1552
    %v1554 = vpop.f32.mrf.mxu0
    %v1555 = vpop.f32.mrf.mxu0
    %v1556 = vpop.f32.mrf.mxu0
    %1557 = vdwg.mxu0
    %v1558 = vmax.f32 %v1553, 0.0
    %s1559 = scalar_lea.vmem [#allocation8], 448
    %v1560 = vld [vmem:[%s1559] sm:$0xf]
    %v1561 = vld [vmem:[%s1559 + $0x4] sm:$0xf]
    %v1562 = vld [vmem:[%s1559 + $0x8] sm:$0xf]
    %v1563 = vld [vmem:[%s1559 + $0xc] sm:$0xf]
    %v1564 = vld [vmem:[%s1559 + $0x10] sm:$0xf]
    %v1565 = vld [vmem:[%s1559 + $0x14] sm:$0xf]
    %v1566 = vld [vmem:[%s1559 + $0x18] sm:$0xf]
    %v1567 = vld [vmem:[%s1559 + $0x1c] sm:$0xf]
    %v1568 = vld [vmem:[%s1559 + $0x20] sm:$0xf]
    %v1569 = vld [vmem:[%s1559 + $0x24] sm:$0xf]
    %v1570 = vld [vmem:[%s1559 + $0x28] sm:$0xf]
    %v1571 = vld [vmem:[%s1559 + $0x2c] sm:$0xf]
    %v1572 = vld [vmem:[%s1559 + $0x30] sm:$0xf]
    %v1573 = vld [vmem:[%s1559 + $0x34] sm:$0xf]
    %v1574 = vld [vmem:[%s1559 + $0x38] sm:$0xf]
    %v1575 = vld [vmem:[%s1559 + $0x3c] sm:$0xf]
    %v1576 = vlaneseq
    %v1577 = vshrl.u32 %v1576, 7
    %v1578 = vsub.s32 7, %v1577
    %v1579 = vrot.slane %v89, %v1578
    %v1596 = vunpack.c.l.b16 %v1560
    %v1597 = vunpack.c.l.b16 %v1561
    %v1598 = vunpack.c.l.b16 %v1562
    %v1599 = vunpack.c.l.b16 %v1563
    %v1600 = vunpack.c.l.b16 %v1564
    %v1601 = vunpack.c.l.b16 %v1565
    %v1602 = vunpack.c.l.b16 %v1566
    %v1603 = vunpack.c.l.b16 %v1567
    %v1604 = vunpack.c.l.b16 %v1568
    %v1605 = vunpack.c.l.b16 %v1569
    %v1606 = vunpack.c.l.b16 %v1570
    %v1607 = vunpack.c.l.b16 %v1571
    %v1608 = vunpack.c.l.b16 %v1572
    %v1609 = vunpack.c.l.b16 %v1573
    %v1610 = vunpack.c.l.b16 %v1574
    %v1611 = vunpack.c.l.b16 %v1575
    %v1612 = vpack.c.b16 %v1597, %v1596
    %v1613 = vpack.c.b16 %v1599, %v1598
    %v1614 = vpack.c.b16 %v1601, %v1600
    %v1615 = vpack.c.b16 %v1603, %v1602
    %v1616 = vpack.c.b16 %v1605, %v1604
    %v1617 = vpack.c.b16 %v1607, %v1606
    %v1618 = vpack.c.b16 %v1609, %v1608
    %v1619 = vpack.c.b16 %v1611, %v1610
    %1628 = vmatprep.subr.bf16.mxu0 0
    %1629 = vmatpush1.bf16.msra.mxu0 %v1619
    %1630 = vmatprep.subr.bf16.mxu0 0
    %1631 = vmatpush1.bf16.msra.mxu0 %v1618
    %1632 = vmatprep.subr.bf16.mxu0 0
    %1633 = vmatpush1.bf16.msra.mxu0 %v1617
    %1634 = vmatprep.subr.bf16.mxu0 0
    %1635 = vmatpush1.bf16.msra.mxu0 %v1616
    %1636 = vmatprep.subr.bf16.mxu0 0
    %1637 = vmatpush1.bf16.msra.mxu0 %v1615
    %1638 = vmatprep.subr.bf16.mxu0 0
    %1639 = vmatpush1.bf16.msra.mxu0 %v1614
    %1640 = vmatprep.subr.bf16.mxu0 0
    %1641 = vmatpush1.bf16.msra.mxu0 %v1613
    %1642 = vmatprep.subr.bf16.mxu0 0
    %1643 = vmatpush1.bf16.msra.mxu0 %v1612
    %1644 = vmatprep.subr.bf16.mxu0 0
    %1645 = vmatpush2.bf16.msra.mxu0 0
    %1646 = vmatprep.subr.bf16.mxu0 0
    %1647 = vmatpush2.bf16.msra.mxu0 0
    %1648 = vmatprep.subr.bf16.mxu0 0
    %1649 = vmatpush2.bf16.msra.mxu0 0
    %1650 = vmatprep.subr.bf16.mxu0 0
    %1651 = vmatpush2.bf16.msra.mxu0 0
    %1652 = vmatprep.subr.bf16.mxu0 0
    %1653 = vmatpush2.bf16.msra.mxu0 0
    %1654 = vmatprep.subr.bf16.mxu0 0
    %1655 = vmatpush2.bf16.msra.mxu0 0
    %1656 = vmatprep.subr.bf16.mxu0 0
    %1657 = vmatpush2.bf16.msra.mxu0 0
    %1658 = vmatprep.subr.bf16.mxu0 0
    %1659 = vmatpush2.bf16.msra.mxu0 0
    %1660 = vmatprep.mubr.bf16.mxu0 0
    %1661 = vmatmul.mubr.bf16.gmra.mxu0 %v777
    %v1662 = vpop.f32.mrf.mxu0
    %v1663 = vadd.f32 %v1579, %v1662
    %v1664 = vpop.f32.mrf.mxu0
    %v1665 = vpop.f32.mrf.mxu0
    %v1666 = vpop.f32.mrf.mxu0
    %1667 = vdwg.mxu0
    %v1668 = vadd.f32 %v1558, %v1663
    %v1669 = vpack.c.bf16 %v1226, %v1225
    %v1670 = vpack.c.bf16 %v1668, %v1668
    %1671 = vmatprep.subr.bf16.mxu0 0
    %1672 = vmatpush1.bf16.xpose.msra.mxu0 0
    %1673 = vmatprep.subr.bf16.mxu0 0
    %1674 = vmatpush1.bf16.xpose.msra.mxu0 0
    %1675 = vmatprep.subr.bf16.mxu0 0
    %1676 = vmatpush1.bf16.xpose.msra.mxu0 0
    %1677 = vmatprep.subr.bf16.mxu0 0
    %1678 = vmatpush1.bf16.xpose.msra.mxu0 0
    %1679 = vmatprep.subr.bf16.mxu0 0
    %1680 = vmatpush1.bf16.xpose.msra.mxu0 0
    %1681 = vmatprep.subr.bf16.mxu0 0
    %1682 = vmatpush1.bf16.xpose.msra.mxu0 0
    %1683 = vmatprep.subr.bf16.mxu0 0
    %1684 = vmatpush1.bf16.xpose.msra.mxu0 0
    %1685 = vmatprep.subr.bf16.mxu0 0
    %1686 = vmatpush1.bf16.xpose.msra.mxu0 %v1670
    %1687 = vmatprep.subr.bf16.mxu0 0
    %1688 = vmatpush2.bf16.xpose.msra.mxu0 0
    %1689 = vmatprep.subr.bf16.mxu0 0
    %1690 = vmatpush2.bf16.xpose.msra.mxu0 0
    %1691 = vmatprep.subr.bf16.mxu0 0
    %1692 = vmatpush2.bf16.xpose.msra.mxu0 0
    %1693 = vmatprep.subr.bf16.mxu0 0
    %1694 = vmatpush2.bf16.xpose.msra.mxu0 0
    %1695 = vmatprep.subr.bf16.mxu0 0
    %1696 = vmatpush2.bf16.xpose.msra.mxu0 0
    %1697 = vmatprep.subr.bf16.mxu0 0
    %1698 = vmatpush2.bf16.xpose.msra.mxu0 0
    %1699 = vmatprep.subr.bf16.mxu0 0
    %1700 = vmatpush2.bf16.xpose.msra.mxu0 0
    %1701 = vmatprep.subr.bf16.mxu0 0
    %1702 = vmatpush2.bf16.xpose.msra.mxu0 0
    %1703 = vmatprep.mubr.bf16.mxu0 0
    %1704 = vmatmul.mubr.bf16.gmra.mxu0 %v1669
    %v1705 = vpop.f32.mrf.mxu0
    %v1706 = vadd.f32 0.0, %v1705
    %v1707 = vpop.f32.mrf.mxu0
    %v1708 = vpop.f32.mrf.mxu0
    %v1709 = vadd.f32 0.0, %v1708
    %v1710 = vpop.f32.mrf.mxu0
    %1711 = vdwg.mxu0
    %v1712 = vld [vmem:[%s3] sm:$0xff]
    %v1713 = vld [vmem:[%s3 + $0x8] sm:$0xf]
    %v1714 = vsub.f32 0.0, %v1706
    %v1715 = vsub.f32 0.0, %v1709
    %v1716 = vmax.f32 %v1714, 0.0
    %v1717 = vmax.f32 %v1715, 0.0
    %v1718 = vand.u32 2147483647, %v1714
    %v1719 = vand.u32 2147483647, %v1715
    %v1720 = vsub.f32 0.0, %v1718
    %v1721 = vsub.f32 0.0, %v1719
    %v1722 = vmul.f32 %v1720, 1.442695
    %v1723 = vpow.pop %v1722
    %v1724 = vmul.f32 %v1721, 1.442695
    %v1725 = vpow.pop %v1724
    %v1726 = vadd.f32 %v1723, 1.0
    %v1727 = vlog2.pop %v1726
    %v1728 = vmul.f32 %v1727, 0.6931472
    %v1729 = vmul.f32 -0.5, %v1723
    %v1730 = vadd.f32 %v1729, 1.0
    %v1731 = vmul.f32 %v1730, %v1723
    %v1732 = vand.u32 2147483647, %v1723
    %vm1733 = vcmp.lt.f32.partialorder %v1732, 0.0004427343
    %v1734 = vsel %vm1733, %v1731, %v1728
    %v1735 = vadd.f32 %v1725, 1.0
    %v1736 = vlog2.pop %v1735
    %v1737 = vmul.f32 %v1736, 0.6931472
    %v1738 = vmul.f32 -0.5, %v1725
    %v1739 = vadd.f32 %v1738, 1.0
    %v1740 = vmul.f32 %v1739, %v1725
    %v1741 = vand.u32 2147483647, %v1725
    %vm1742 = vcmp.lt.f32.partialorder %v1741, 0.0004427343
    %v1743 = vsel %vm1742, %v1740, %v1737
    %v1744 = vadd.f32 %v1716, %v1734
    %v1745 = vadd.f32 %v1717, %v1743
    %v1746 = vadd.f32 %v1744, %v1706
    %v1747 = vadd.f32 %v1745, %v1709
    %vm1748 = vcmask 23552
    %v1749 = vsel %vm1748, %v1746, 0.0
    %vm1750 = vcmask 19456
    %v1751 = vsel %vm1750, %v1747, 0.0
    %v1752 = vadd.f32 %v1749, %v1751
    %1753 = vadd.xlane.f32.xlu0 %v1752
    %v1754 = vpop.xlane.xlu0 %1753
    %v1755 = vrot.slane %v1754, 4
    %v1756 = vadd.f32 %v1754, %v1755
    %v1757 = vrot.slane %v1756, 2
    %v1758 = vadd.f32 %v1756, %v1757
    %v1759 = vrot.slane %v1758, 1
    %v1760 = vadd.f32 %v1758, %v1759
    %s1761 = vtos %v1760
    %v1762 = vmul.f32 %v1712, %v1744
    %v1763 = vmul.f32 %v1713, %v1745
    %v1764 = vsel %vm1748, %v1762, 0.0
    %v1765 = vsel %vm1750, %v1763, 0.0
    %v1766 = vadd.f32 %v1764, %v1765
    %1767 = vadd.xlane.f32.xlu0 %v1766
    %v1768 = vpop.xlane.xlu0 %1767
    %v1769 = vrot.slane %v1768, 4
    %v1770 = vadd.f32 %v1768, %v1769
    %v1771 = vrot.slane %v1770, 2
    %v1772 = vadd.f32 %v1770, %v1771
    %v1773 = vrot.slane %v1772, 1
    %v1774 = vadd.f32 %v1772, %v1773
    %s1775 = vtos %v1774
    %v1776 = vmul.f32 %v1712, %v1706
    %v1777 = vmul.f32 %v1713, %v1709
    %v1778 = vsel %vm1748, %v1776, 0.0
    %v1779 = vsel %vm1750, %v1777, 0.0
    %v1780 = vadd.f32 %v1778, %v1779
    %1781 = vadd.xlane.f32.xlu0 %v1780
    %v1782 = vpop.xlane.xlu0 %1781
    %v1783 = vrot.slane %v1782, 4
    %v1784 = vadd.f32 %v1782, %v1783
    %v1785 = vrot.slane %v1784, 2
    %v1786 = vadd.f32 %v1784, %v1785
    %v1787 = vrot.slane %v1786, 1
    %v1788 = vadd.f32 %v1786, %v1787
    %s1789 = vtos %v1788
    %s1790 = ssub.f32 8.317766, %s1775
    %v1791 = vrcp.pop 12.0
    %s1792 = vtos %v1791
    %s1793 = smul.f32 %s1790, %s1792
    %s1794 = ssub.f32 %s1761, %s1775
    %s1795 = ssub.f32 %s1794, %s1789
    %s1796 = ssub.f32 %s1795, 16.635532
    %v1797 = vrcp.pop 24.0
    %s1798 = vtos %v1797
    %s1799 = smul.f32 %s1796, %s1798
    %s1800 = ssub.f32 %s1799, %s1793
    %s1801 = scalar_lea.smem [#allocation10], 0
    %1802 = sst [smem:[%s1801]] %s1800
    // Predicated region
    $region50: #{tpu_custom_call.1} parent=1 // pred_check
      _
    $region51: #{tpu_custom_call.1} parent=1 // pred_check_branch
      %1804 = sbr.rel (0) target = $region53
    $region52: #{tpu_custom_call.1} parent=1 // pred_region
      %s1806 = ssub.s32 16, 16
      %1807 = vsyncadd [#allocation4], %s1806
      %1810 = dma.smem_to_hbm [#allocation10], 16, %s8, [#allocation4]
    $region53: #{tpu_custom_call.1} parent=1 // pred_fallthru
      _
    // Predicated region
    $region54: #{tpu_custom_call.1} parent=1 // pred_check
      _
    $region55: #{tpu_custom_call.1} parent=1 // pred_check_branch
      %1812 = sbr.rel (0) target = $region57
    $region56: #{tpu_custom_call.1} parent=1 // pred_region
      %1813 = dma.done [#allocation4], 16
    $region57: #{tpu_custom_call.1} parent=1 // pred_fallthru
      _
    %1814 = sfence
    %1815 = vsyncpa [#allocation3], 1
    %1816 = vsyncpa [#allocation6], 1
    %1817 = vsyncpa [#allocation9], 1
    %1818 = vsyncpa [#allocation4], 1

</llo_original>
